<compile_context>
chip_gen: v7x
topology: tpu7x:2x2x1
jax: 0.10.0
libtpu: 0.0.40
codegen_flags: <defaults>
</compile_context>

<pallas_src>
import math

import jax
import jax.numpy as jnp
from jax.experimental import pallas as pl
from jax.experimental.pallas import tpu as pltpu  # noqa: F401  (kept for TPU-specific tuning)

B, S, D, H, DFF = 2, 8, 32, 4, 64   # batch, seq, d_model, heads, d_ff
DK = D // H
EPS = 1e-6
NEG_INF = -1e9


def encoder_block_kernel(x_ref, mask_ref,
                         ln1_a_ref, ln1_b_ref,
                         wqkv_ref, bqkv_ref, wo_ref, bo_ref,
                         ln2_a_ref, ln2_b_ref,
                         w1_ref, b1_ref, w2_ref, b2_ref,
                         out_ref):
    # Whole batch in one invocation; everything lives as full VMEM blocks.
    x = x_ref[...]                        # (B*S, D) flattened rows
    mask = mask_ref[...]                  # (B, 1, S)

    def layer_norm(v, alpha, bias):
        mean = jnp.mean(v, axis=-1, keepdims=True)
        # torch.Tensor.std defaults to the unbiased estimator (ddof = 1);
        # EPS is added to std (not var) to match the PyTorch module.
        var = jnp.sum((v - mean) ** 2, axis=-1, keepdims=True) / (v.shape[-1] - 1)
        inv_std = pl.reciprocal(jnp.sqrt(var) + EPS, approx=True)   # EUP slot
        return alpha * (v - mean) * inv_std + bias

    # ---- residual connection 0: pre-norm multi-head self-attention ----------
    xn = layer_norm(x, ln1_a_ref[...], ln1_b_ref[...])
    # Fused QKV: one (B*S, D) x (D, 3D) MXU push instead of three 32-lane ones.
    qkv = jnp.dot(xn, wqkv_ref[...], preferred_element_type=jnp.float32) + bqkv_ref[...]

    scale = 1.0 / math.sqrt(DK)
    q = qkv[:, 0 * D:1 * D] * scale       # fold 1/sqrt(dk) into q once
    k = qkv[:, 1 * D:2 * D]
    v = qkv[:, 2 * D:3 * D]

    def to_heads(t):
        # (B*S, D) -> (B*H, S, DK) via one reshape + one transpose (no
        # per-head slices, no concats).
        return jnp.transpose(t.reshape(B, S, H, DK), (0, 2, 1, 3)).reshape(B * H, S, DK)

    qh, kh, vh = to_heads(q), to_heads(k), to_heads(v)   # (B*H, S, DK)

    # Single batched score matmul over the merged (B, H) batch dim.
    scores = jnp.einsum('nqd,nkd->nqk', qh, kh,
                        preferred_element_type=jnp.float32)          # (B*H, S, S)

    # Mask applied ONCE by broadcasting the (B,1,S) mask over heads / q-rows
    # (hard-set to -1e9, matching torch masked_fill_(mask == 0, -1e9)).
    scores = scores.reshape(B, H, S, S)
    scores = jnp.where(mask[:, None, :, :] == 0.0, NEG_INF, scores)
    scores = scores.reshape(B * H, S, S)

    # Single-pass softmax; denominator reciprocal on the EUP (free slot).
    m = jnp.max(scores, axis=-1, keepdims=True)
    e = jnp.exp(scores - m)
    p = e * pl.reciprocal(jnp.sum(e, axis=-1, keepdims=True), approx=True)

    ctx = jnp.einsum('nqk,nkd->nqd', p, vh,
                     preferred_element_type=jnp.float32)             # (B*H, S, DK)
    # Re-pack heads into the feature dim with one transpose + reshape.
    attn = jnp.transpose(ctx.reshape(B, H, S, DK), (0, 2, 1, 3)).reshape(B * S, D)
    attn = jnp.dot(attn, wo_ref[...], preferred_element_type=jnp.float32) + bo_ref[...]
    # TODO(synk): dropout is the identity here (eval mode).
    x = x + attn

    # ---- residual connection 1: pre-norm feed-forward ------------------------
    xn = layer_norm(x, ln2_a_ref[...], ln2_b_ref[...])
    h1 = jnp.dot(xn, w1_ref[...], preferred_element_type=jnp.float32) + b1_ref[...]
    h1 = jnp.maximum(h1, 0.0)
    ff = jnp.dot(h1, w2_ref[...], preferred_element_type=jnp.float32) + b2_ref[...]

    out_ref[...] = x + ff                 # (B*S, D) flat slab


def fuse_encoder_params(params):
    """One-time parameter prep (call OUTSIDE the per-step path): fuse QKV."""
    (ln1_a, ln1_b, wq, bq, wk, bk, wv, bv, wo, bo,
     ln2_a, ln2_b, w1, b1, w2, b2) = params
    wqkv = jnp.concatenate([wq, wk, wv], axis=1)     # (D, 3D)
    bqkv = jnp.concatenate([bq, bk, bv], axis=1)     # (1, 3D)
    return (ln1_a, ln1_b, wqkv, bqkv, wo, bo, ln2_a, ln2_b, w1, b1, w2, b2)


@jax.jit
def encoder_block(x, mask, fused_params):
    # No grid: one invocation, every operand is a full-array VMEM block, so
    # there is no pipeline/double-buffer overhead at this toy size.
    out = pl.pallas_call(
        encoder_block_kernel,
        out_shape=jax.ShapeDtypeStruct((B * S, D), jnp.float32),
    )(x.reshape(B * S, D), mask, *fused_params)
    return out.reshape(B, S, D)


# ---------------- pure-JAX reference (for correctness check) ----------------
def encoder_block_ref(x, mask, params):
    (ln1_a, ln1_b, wq, bq, wk, bk, wv, bv, wo, bo,
     ln2_a, ln2_b, w1, b1, w2, b2) = params

    def layer_norm(v, a, b):
        mean = jnp.mean(v, axis=-1, keepdims=True)
        std = jnp.std(v, axis=-1, keepdims=True, ddof=1)
        return a * (v - mean) / (std + EPS) + b

    xn = layer_norm(x, ln1_a, ln1_b)
    q, k, v = xn @ wq + bq, xn @ wk + bk, xn @ wv + bv

    def split(t):  # (B,S,D) -> (B,H,S,DK)
        return t.reshape(B, S, H, DK).transpose(0, 2, 1, 3)

    qh, kh, vh = split(q), split(k), split(v)
    scores = jnp.einsum('bhqd,bhkd->bhqk', qh, kh) / math.sqrt(DK)
    scores = jnp.where(mask[:, None, :, :] == 0.0, NEG_INF, scores)
    p = jax.nn.softmax(scores, axis=-1)
    attn = jnp.einsum('bhqk,bhkd->bhqd', p, vh)
    attn = attn.transpose(0, 2, 1, 3).reshape(B, S, D) @ wo + bo
    x = x + attn
    xn = layer_norm(x, ln2_a, ln2_b)
    ff = jnp.maximum(xn @ w1 + b1, 0.0) @ w2 + b2
    return x + ff


if __name__ == "__main__":
    key = jax.random.PRNGKey(0)
    keys = jax.random.split(key, 12)

    x = jax.random.normal(keys[0], (B, S, D), dtype=jnp.float32)
    mask = jnp.ones((B, 1, S), dtype=jnp.float32)
    mask = mask.at[1, 0, S - 3:].set(0.0)       # pad last 3 tokens of batch 1

    def w(k, shape):
        return 0.05 * jax.random.normal(k, shape, dtype=jnp.float32)

    params = [
        jnp.ones((1, D), jnp.float32), jnp.zeros((1, D), jnp.float32),   # LayerNorm1 alpha/bias
        w(keys[1], (D, D)), w(keys[2], (1, D)),                          # w_q, b_q
        w(keys[3], (D, D)), w(keys[4], (1, D)),                          # w_k, b_k
        w(keys[5], (D, D)), w(keys[6], (1, D)),                          # w_v, b_v
        w(keys[7], (D, D)), w(keys[8], (1, D)),                          # w_o, b_o
        jnp.ones((1, D), jnp.float32), jnp.zeros((1, D), jnp.float32),   # LayerNorm2 alpha/bias
        w(keys[9], (D, DFF)), w(keys[10], (1, DFF)),                     # linear_1
        w(keys[11], (DFF, D)), jnp.zeros((1, D), jnp.float32),           # linear_2
    ]

    # Fuse QKV weights/biases once, outside the jitted per-call path.
    fused = jax.tree_util.tree_map(jax.block_until_ready, fuse_encoder_params(params))

    out = jax.block_until_ready(encoder_block(x, mask, fused))
    ref = encoder_block_ref(x, mask, params)
    max_err = float(jnp.max(jnp.abs(out - ref)))
    assert out.shape == (B, S, D)
    # Tolerance slightly looser than pure-f32 rounding because the softmax
    # denominator and LayerNorm inverse-std use the EUP approximate reciprocal
    # (per perf feedback); genuine bugs (mask/LN/projection/head-packing
    # errors) show up as >1e-2 deviations.
    assert jnp.allclose(out, ref, atol=2e-3, rtol=2e-3), f"max_err={max_err}"
    print("KERNEL_OK")
</pallas_src>

<mosaic_0001>
module attributes {stable_mosaic.version = 11 : i64} {
  func.func @encoder_block_kernel(%arg0: memref<16x32xf32, #tpu.memory_space<vmem>>, %arg1: memref<2x1x8xf32, #tpu.memory_space<vmem>>, %arg2: memref<1x32xf32, #tpu.memory_space<vmem>>, %arg3: memref<1x32xf32, #tpu.memory_space<vmem>>, %arg4: memref<32x96xf32, #tpu.memory_space<vmem>>, %arg5: memref<1x96xf32, #tpu.memory_space<vmem>>, %arg6: memref<32x32xf32, #tpu.memory_space<vmem>>, %arg7: memref<1x32xf32, #tpu.memory_space<vmem>>, %arg8: memref<1x32xf32, #tpu.memory_space<vmem>>, %arg9: memref<1x32xf32, #tpu.memory_space<vmem>>, %arg10: memref<32x64xf32, #tpu.memory_space<vmem>>, %arg11: memref<1x64xf32, #tpu.memory_space<vmem>>, %arg12: memref<64x32xf32, #tpu.memory_space<vmem>>, %arg13: memref<1x32xf32, #tpu.memory_space<vmem>>, %arg14: memref<16x32xf32, #tpu.memory_space<vmem>>) attributes {dimension_semantics = [], scalar_prefetch = 0 : i64, scratch_operands = 0 : i64, tpu.core_type = #tpu.core_type<tc>} {
    %c0 = arith.constant 0 : index
    %c0_0 = arith.constant 0 : index
    %0 = vector.load %arg0[%c0, %c0_0] : memref<16x32xf32, #tpu.memory_space<vmem>>, vector<16x32xf32>
    %c0_1 = arith.constant 0 : index
    %c0_2 = arith.constant 0 : index
    %c0_3 = arith.constant 0 : index
    %1 = vector.load %arg1[%c0_1, %c0_2, %c0_3] : memref<2x1x8xf32, #tpu.memory_space<vmem>>, vector<2x1x8xf32>
    %c0_4 = arith.constant 0 : index
    %c0_5 = arith.constant 0 : index
    %2 = vector.load %arg2[%c0_4, %c0_5] : memref<1x32xf32, #tpu.memory_space<vmem>>, vector<1x32xf32>
    %c0_6 = arith.constant 0 : index
    %c0_7 = arith.constant 0 : index
    %3 = vector.load %arg3[%c0_6, %c0_7] : memref<1x32xf32, #tpu.memory_space<vmem>>, vector<1x32xf32>
    %cst = arith.constant dense<0.000000e+00> : vector<16xf32>
    %4 = vector.multi_reduction <add>, %0, %cst [1] : vector<16x32xf32> to vector<16xf32>
    %5 = vector.shape_cast %4 : vector<16xf32> to vector<16x1xf32>
    %cst_8 = arith.constant 3.200000e+01 : f32
    %6 = vector.broadcast %cst_8 : f32 to vector<16x1xf32>
    %7 = arith.divf %5, %6 : vector<16x1xf32>
    %8 = vector.broadcast %7 : vector<16x1xf32> to vector<16x32xf32>
    %9 = arith.subf %0, %8 : vector<16x32xf32>
    %10 = arith.mulf %9, %9 : vector<16x32xf32>
    %cst_9 = arith.constant dense<0.000000e+00> : vector<16xf32>
    %11 = vector.multi_reduction <add>, %10, %cst_9 [1] : vector<16x32xf32> to vector<16xf32>
    %12 = vector.shape_cast %11 : vector<16xf32> to vector<16x1xf32>
    %cst_10 = arith.constant 3.100000e+01 : f32
    %13 = vector.broadcast %cst_10 : f32 to vector<16x1xf32>
    %14 = arith.divf %12, %13 : vector<16x1xf32>
    %15 = math.sqrt %14 : vector<16x1xf32>
    %cst_11 = arith.constant 9.99999997E-7 : f32
    %16 = vector.broadcast %cst_11 : f32 to vector<16x1xf32>
    %17 = arith.addf %15, %16 : vector<16x1xf32>
    %18 = tpu.reciprocal %17 {approx = true} : vector<16x1xf32> -> vector<16x1xf32>
    %19 = vector.broadcast %7 : vector<16x1xf32> to vector<16x32xf32>
    %20 = arith.subf %0, %19 : vector<16x32xf32>
    %21 = vector.broadcast %2 : vector<1x32xf32> to vector<16x32xf32>
    %22 = arith.mulf %21, %20 : vector<16x32xf32>
    %23 = vector.broadcast %18 : vector<16x1xf32> to vector<16x32xf32>
    %24 = arith.mulf %22, %23 : vector<16x32xf32>
    %25 = vector.broadcast %3 : vector<1x32xf32> to vector<16x32xf32>
    %26 = arith.addf %24, %25 : vector<16x32xf32>
    %c0_12 = arith.constant 0 : index
    %c0_13 = arith.constant 0 : index
    %27 = vector.load %arg4[%c0_12, %c0_13] : memref<32x96xf32, #tpu.memory_space<vmem>>, vector<32x96xf32>
    %cst_14 = arith.constant dense<0.000000e+00> : vector<16x96xf32>
    %28 = tpu.matmul %26, %27, %cst_14 {dimension_numbers = #tpu.dot_dimension_numbers<[1], [0], [0], [1], [0, 0, 1, 1], [], []>} : vector<16x32xf32>, vector<32x96xf32>, vector<16x96xf32> -> vector<16x96xf32>
    %c0_15 = arith.constant 0 : index
    %c0_16 = arith.constant 0 : index
    %29 = vector.load %arg5[%c0_15, %c0_16] : memref<1x96xf32, #tpu.memory_space<vmem>>, vector<1x96xf32>
    %30 = vector.broadcast %29 : vector<1x96xf32> to vector<16x96xf32>
    %31 = arith.addf %28, %30 : vector<16x96xf32>
    %32 = vector.extract_strided_slice %31 {offsets = [0, 0], sizes = [16, 32], strides = [1, 1]} : vector<16x96xf32> to vector<16x32xf32>
    %cst_17 = arith.constant 0.353553385 : f32
    %33 = vector.broadcast %cst_17 : f32 to vector<16x32xf32>
    %34 = arith.mulf %32, %33 : vector<16x32xf32>
    %35 = vector.extract_strided_slice %31 {offsets = [0, 32], sizes = [16, 32], strides = [1, 1]} : vector<16x96xf32> to vector<16x32xf32>
    %36 = vector.extract_strided_slice %31 {offsets = [0, 64], sizes = [16, 32], strides = [1, 1]} : vector<16x96xf32> to vector<16x32xf32>
    %37 = vector.shape_cast %34 : vector<16x32xf32> to vector<2x8x4x8xf32>
    %38 = tpu.transpose %37, [0, 2, 1, 3] : vector<2x8x4x8xf32> -> vector<2x4x8x8xf32>
    %39 = vector.shape_cast %38 : vector<2x4x8x8xf32> to vector<8x8x8xf32>
    %40 = vector.shape_cast %35 : vector<16x32xf32> to vector<2x8x4x8xf32>
    %41 = tpu.transpose %40, [0, 2, 1, 3] : vector<2x8x4x8xf32> -> vector<2x4x8x8xf32>
    %42 = vector.shape_cast %41 : vector<2x4x8x8xf32> to vector<8x8x8xf32>
    %43 = vector.shape_cast %36 : vector<16x32xf32> to vector<2x8x4x8xf32>
    %44 = tpu.transpose %43, [0, 2, 1, 3] : vector<2x8x4x8xf32> -> vector<2x4x8x8xf32>
    %45 = vector.shape_cast %44 : vector<2x4x8x8xf32> to vector<8x8x8xf32>
    "tpu.trace_start"() <{level = 10 : i32, message = "nqd,nkd->nqk"}> : () -> ()
    %cst_18 = arith.constant dense<0.000000e+00> : vector<8x8x8xf32>
    %46 = tpu.matmul %39, %42, %cst_18 {dimension_numbers = #tpu.dot_dimension_numbers<[2], [2], [1], [1], [0, 0, 0, 1, 1, 1], [0], [0]>} : vector<8x8x8xf32>, vector<8x8x8xf32>, vector<8x8x8xf32> -> vector<8x8x8xf32>
    "tpu.trace_stop"() : () -> ()
    %47 = vector.shape_cast %46 : vector<8x8x8xf32> to vector<2x4x8x8xf32>
    %48 = vector.shape_cast %1 : vector<2x1x8xf32> to vector<2x1x1x8xf32>
    %cst_19 = arith.constant 0.000000e+00 : f32
    %49 = vector.broadcast %cst_19 : f32 to vector<2x1x1x8xf32>
    %50 = arith.cmpf oeq, %48, %49 : vector<2x1x1x8xf32>
    %cst_20 = arith.constant -1.000000e+09 : f32
    %51 = vector.shape_cast %50 : vector<2x1x1x8xi1> to vector<2x1x1x8xi1>
    %52 = vector.broadcast %51 : vector<2x1x1x8xi1> to vector<2x4x8x8xi1>
    %53 = vector.broadcast %cst_20 : f32 to vector<2x4x8x8xf32>
    %54 = arith.select %52, %53, %47 : vector<2x4x8x8xi1>, vector<2x4x8x8xf32>
    %55 = vector.shape_cast %54 : vector<2x4x8x8xf32> to vector<8x8x8xf32>
    %cst_21 = arith.constant dense<0xFF800000> : vector<8x8xf32>
    %56 = vector.multi_reduction <maximumf>, %55, %cst_21 [2] : vector<8x8x8xf32> to vector<8x8xf32>
    %57 = vector.shape_cast %56 : vector<8x8xf32> to vector<8x8x1xf32>
    %58 = vector.broadcast %57 : vector<8x8x1xf32> to vector<8x8x8xf32>
    %59 = arith.subf %55, %58 : vector<8x8x8xf32>
    %60 = math.exp %59 : vector<8x8x8xf32>
    %cst_22 = arith.constant dense<0.000000e+00> : vector<8x8xf32>
    %61 = vector.multi_reduction <add>, %60, %cst_22 [2] : vector<8x8x8xf32> to vector<8x8xf32>
    %62 = vector.shape_cast %61 : vector<8x8xf32> to vector<8x8x1xf32>
    %63 = tpu.reciprocal %62 {approx = true} : vector<8x8x1xf32> -> vector<8x8x1xf32>
    %64 = vector.broadcast %63 : vector<8x8x1xf32> to vector<8x8x8xf32>
    %65 = arith.mulf %60, %64 : vector<8x8x8xf32>
    "tpu.trace_start"() <{level = 10 : i32, message = "nqk,nkd->nqd"}> : () -> ()
    %cst_23 = arith.constant dense<0.000000e+00> : vector<8x8x8xf32>
    %66 = tpu.matmul %65, %45, %cst_23 {dimension_numbers = #tpu.dot_dimension_numbers<[2], [1], [1], [2], [0, 0, 0, 1, 1, 2], [0], [0]>} : vector<8x8x8xf32>, vector<8x8x8xf32>, vector<8x8x8xf32> -> vector<8x8x8xf32>
    "tpu.trace_stop"() : () -> ()
    %67 = vector.shape_cast %66 : vector<8x8x8xf32> to vector<2x4x8x8xf32>
    %68 = tpu.transpose %67, [0, 2, 1, 3] : vector<2x4x8x8xf32> -> vector<2x8x4x8xf32>
    %69 = vector.shape_cast %68 : vector<2x8x4x8xf32> to vector<16x32xf32>
    %c0_24 = arith.constant 0 : index
    %c0_25 = arith.constant 0 : index
    %70 = vector.load %arg6[%c0_24, %c0_25] : memref<32x32xf32, #tpu.memory_space<vmem>>, vector<32x32xf32>
    %cst_26 = arith.constant dense<0.000000e+00> : vector<16x32xf32>
    %71 = tpu.matmul %69, %70, %cst_26 {dimension_numbers = #tpu.dot_dimension_numbers<[1], [0], [0], [1], [0, 0, 1, 1], [], []>} : vector<16x32xf32>, vector<32x32xf32>, vector<16x32xf32> -> vector<16x32xf32>
    %c0_27 = arith.constant 0 : index
    %c0_28 = arith.constant 0 : index
    %72 = vector.load %arg7[%c0_27, %c0_28] : memref<1x32xf32, #tpu.memory_space<vmem>>, vector<1x32xf32>
    %73 = vector.broadcast %72 : vector<1x32xf32> to vector<16x32xf32>
    %74 = arith.addf %71, %73 : vector<16x32xf32>
    %75 = arith.addf %0, %74 : vector<16x32xf32>
    %c0_29 = arith.constant 0 : index
    %c0_30 = arith.constant 0 : index
    %76 = vector.load %arg8[%c0_29, %c0_30] : memref<1x32xf32, #tpu.memory_space<vmem>>, vector<1x32xf32>
    %c0_31 = arith.constant 0 : index
    %c0_32 = arith.constant 0 : index
    %77 = vector.load %arg9[%c0_31, %c0_32] : memref<1x32xf32, #tpu.memory_space<vmem>>, vector<1x32xf32>
    %cst_33 = arith.constant dense<0.000000e+00> : vector<16xf32>
    %78 = vector.multi_reduction <add>, %75, %cst_33 [1] : vector<16x32xf32> to vector<16xf32>
    %79 = vector.shape_cast %78 : vector<16xf32> to vector<16x1xf32>
    %cst_34 = arith.constant 3.200000e+01 : f32
    %80 = vector.broadcast %cst_34 : f32 to vector<16x1xf32>
    %81 = arith.divf %79, %80 : vector<16x1xf32>
    %82 = vector.broadcast %81 : vector<16x1xf32> to vector<16x32xf32>
    %83 = arith.subf %75, %82 : vector<16x32xf32>
    %84 = arith.mulf %83, %83 : vector<16x32xf32>
    %cst_35 = arith.constant dense<0.000000e+00> : vector<16xf32>
    %85 = vector.multi_reduction <add>, %84, %cst_35 [1] : vector<16x32xf32> to vector<16xf32>
    %86 = vector.shape_cast %85 : vector<16xf32> to vector<16x1xf32>
    %cst_36 = arith.constant 3.100000e+01 : f32
    %87 = vector.broadcast %cst_36 : f32 to vector<16x1xf32>
    %88 = arith.divf %86, %87 : vector<16x1xf32>
    %89 = math.sqrt %88 : vector<16x1xf32>
    %cst_37 = arith.constant 9.99999997E-7 : f32
    %90 = vector.broadcast %cst_37 : f32 to vector<16x1xf32>
    %91 = arith.addf %89, %90 : vector<16x1xf32>
    %92 = tpu.reciprocal %91 {approx = true} : vector<16x1xf32> -> vector<16x1xf32>
    %93 = vector.broadcast %81 : vector<16x1xf32> to vector<16x32xf32>
    %94 = arith.subf %75, %93 : vector<16x32xf32>
    %95 = vector.broadcast %76 : vector<1x32xf32> to vector<16x32xf32>
    %96 = arith.mulf %95, %94 : vector<16x32xf32>
    %97 = vector.broadcast %92 : vector<16x1xf32> to vector<16x32xf32>
    %98 = arith.mulf %96, %97 : vector<16x32xf32>
    %99 = vector.broadcast %77 : vector<1x32xf32> to vector<16x32xf32>
    %100 = arith.addf %98, %99 : vector<16x32xf32>
    %c0_38 = arith.constant 0 : index
    %c0_39 = arith.constant 0 : index
    %101 = vector.load %arg10[%c0_38, %c0_39] : memref<32x64xf32, #tpu.memory_space<vmem>>, vector<32x64xf32>
    %cst_40 = arith.constant dense<0.000000e+00> : vector<16x64xf32>
    %102 = tpu.matmul %100, %101, %cst_40 {dimension_numbers = #tpu.dot_dimension_numbers<[1], [0], [0], [1], [0, 0, 1, 1], [], []>} : vector<16x32xf32>, vector<32x64xf32>, vector<16x64xf32> -> vector<16x64xf32>
    %c0_41 = arith.constant 0 : index
    %c0_42 = arith.constant 0 : index
    %103 = vector.load %arg11[%c0_41, %c0_42] : memref<1x64xf32, #tpu.memory_space<vmem>>, vector<1x64xf32>
    %104 = vector.broadcast %103 : vector<1x64xf32> to vector<16x64xf32>
    %105 = arith.addf %102, %104 : vector<16x64xf32>
    %cst_43 = arith.constant 0.000000e+00 : f32
    %106 = vector.broadcast %cst_43 : f32 to vector<16x64xf32>
    %107 = arith.maximumf %105, %106 : vector<16x64xf32>
    %c0_44 = arith.constant 0 : index
    %c0_45 = arith.constant 0 : index
    %108 = vector.load %arg12[%c0_44, %c0_45] : memref<64x32xf32, #tpu.memory_space<vmem>>, vector<64x32xf32>
    %cst_46 = arith.constant dense<0.000000e+00> : vector<16x32xf32>
    %109 = tpu.matmul %107, %108, %cst_46 {dimension_numbers = #tpu.dot_dimension_numbers<[1], [0], [0], [1], [0, 0, 1, 1], [], []>} : vector<16x64xf32>, vector<64x32xf32>, vector<16x32xf32> -> vector<16x32xf32>
    %c0_47 = arith.constant 0 : index
    %c0_48 = arith.constant 0 : index
    %110 = vector.load %arg13[%c0_47, %c0_48] : memref<1x32xf32, #tpu.memory_space<vmem>>, vector<1x32xf32>
    %111 = vector.broadcast %110 : vector<1x32xf32> to vector<16x32xf32>
    %112 = arith.addf %109, %111 : vector<16x32xf32>
    %113 = arith.addf %75, %112 : vector<16x32xf32>
    %c0_49 = arith.constant 0 : index
    %c0_50 = arith.constant 0 : index
    %114 = vector.load %arg14[%c0_49, %c0_50] : memref<16x32xf32, #tpu.memory_space<vmem>>, vector<16x32xf32>
    tpu.vector_store %arg14[%c0_49, %c0_50], %113 {strides = array<i32>} : memref<16x32xf32, #tpu.memory_space<vmem>>, vector<16x32xf32>,
    return
  }
}

</mosaic_0001>

<llo_original>
// kernel: encoder_block.1
$region0: #{encoder_block.1}
  #allocation0 [shape = 'u32[]', space=smem, size = 0x4, offset = 0x4, fixed_abs, tag = 'smem constant byte address 0x4 - core index']
  #allocation1 [shape = 'u32[144,128]{1,0:T(1,128)}', space=vmem, size = 0x12000, scoped, tag = 'internal scratch']
  %s0 = inlined_call_operand.hbm [shape: f32[16,32], index: 0, kind: input, shape index: {}]
  %s1 = inlined_call_operand.vmem [shape: f32[2,1,8], index: 1, kind: input, shape index: {}]
  %s2 = inlined_call_operand.vmem [shape: f32[1,32], index: 2, kind: input, shape index: {}]
  %s3 = inlined_call_operand.vmem [shape: f32[1,32], index: 3, kind: input, shape index: {}]
  %s4 = inlined_call_operand.vmem [shape: f32[32,96], index: 4, kind: input, shape index: {}]
  %s5 = inlined_call_operand.vmem [shape: f32[1,96], index: 5, kind: input, shape index: {}]
  %s6 = inlined_call_operand.vmem [shape: f32[32,32], index: 6, kind: input, shape index: {}]
  %s7 = inlined_call_operand.vmem [shape: f32[1,32], index: 7, kind: input, shape index: {}]
  %s8 = inlined_call_operand.vmem [shape: f32[1,32], index: 8, kind: input, shape index: {}]
  %s9 = inlined_call_operand.vmem [shape: f32[1,32], index: 9, kind: input, shape index: {}]
  %s10 = inlined_call_operand.vmem [shape: f32[32,64], index: 10, kind: input, shape index: {}]
  %s11 = inlined_call_operand.vmem [shape: f32[1,64], index: 11, kind: input, shape index: {}]
  %s12 = inlined_call_operand.vmem [shape: f32[64,32], index: 12, kind: input, shape index: {}]
  %s13 = inlined_call_operand.vmem [shape: f32[1,32], index: 13, kind: input, shape index: {}]
  %s14 = inlined_call_operand.hbm [shape: f32[16,32], index: 14, kind: output, shape index: {}]
  %s15 = sld [smem:[#allocation0]]
  $region70: #{encoder_block.1} parent=0
    _
  %s17 = ssub.s32 1, %s15
  %s18 = scalar_select 0, %s17, %s15
  $region1: #{encoder_block.1} parent=0
    #allocation2 [shape = 'u8[8192]{0}', space=vmem, size = 0x2000, scoped, tag = 'input window, operand 0, single buffered']
    #allocation3 [shape = 's32[1]{0}', space=sflag, size = 0x4, scoped, tag = 'scoped memory for encoder_block.1']
    #allocation4 [shape = 's32[1]{0}', space=sflag, size = 0x4, scoped, tag = 'scoped memory for encoder_block.1']
    #allocation5 [shape = 'u8[8192]{0}', space=vmem, size = 0x2000, scoped, tag = 'output window, operand 0, single buffered']
    %19 = vsyncpa [#allocation3], 0
    %20 = vsyncpa [#allocation4], 0
    // Predicated region
    $region2: #{encoder_block.1} parent=1 // pred_check
      _
    $region3: #{encoder_block.1} parent=1 // pred_check_branch
      %22 = sbr.rel (0) target = $region5
    $region4: #{encoder_block.1} parent=1 // pred_region
      %s24 = ssub.s32 256, 256
      %25 = vsyncadd [#allocation3], %s24
      %s26 = sshll.u32 [#allocation2], 4
      %s27 = int_to_ptr.vmem [resolvable:$true] %s26
      %32 = dma.hbm_to_vmem [thread:$0]  %s0, 256, %s27, [#allocation3], 128, 128, 8
    $region5: #{encoder_block.1} parent=1 // pred_fallthru
      _
    // Predicated region
    $region6: #{encoder_block.1} parent=1 // pred_check
      _
    $region7: #{encoder_block.1} parent=1 // pred_check_branch
      %34 = sbr.rel (0) target = $region9
    $region8: #{encoder_block.1} parent=1 // pred_region
      _
    $region9: #{encoder_block.1} parent=1 // pred_fallthru
      _
    // Predicated region
    $region10: #{encoder_block.1} parent=1 // pred_check
      _
    $region11: #{encoder_block.1} parent=1 // pred_check_branch
      %36 = sbr.rel (0) target = $region13
    $region12: #{encoder_block.1} parent=1 // pred_region
      _
    $region13: #{encoder_block.1} parent=1 // pred_fallthru
      _
    // Predicated region
    $region14: #{encoder_block.1} parent=1 // pred_check
      _
    $region15: #{encoder_block.1} parent=1 // pred_check_branch
      %38 = sbr.rel (0) target = $region17
    $region16: #{encoder_block.1} parent=1 // pred_region
      _
    $region17: #{encoder_block.1} parent=1 // pred_fallthru
      _
    // Predicated region
    $region18: #{encoder_block.1} parent=1 // pred_check
      _
    $region19: #{encoder_block.1} parent=1 // pred_check_branch
      %40 = sbr.rel (0) target = $region21
    $region20: #{encoder_block.1} parent=1 // pred_region
      _
    $region21: #{encoder_block.1} parent=1 // pred_fallthru
      _
    // Predicated region
    $region22: #{encoder_block.1} parent=1 // pred_check
      _
    $region23: #{encoder_block.1} parent=1 // pred_check_branch
      %42 = sbr.rel (0) target = $region25
    $region24: #{encoder_block.1} parent=1 // pred_region
      _
    $region25: #{encoder_block.1} parent=1 // pred_fallthru
      _
    // Predicated region
    $region26: #{encoder_block.1} parent=1 // pred_check
      _
    $region27: #{encoder_block.1} parent=1 // pred_check_branch
      %44 = sbr.rel (0) target = $region29
    $region28: #{encoder_block.1} parent=1 // pred_region
      _
    $region29: #{encoder_block.1} parent=1 // pred_fallthru
      _
    // Predicated region
    $region30: #{encoder_block.1} parent=1 // pred_check
      _
    $region31: #{encoder_block.1} parent=1 // pred_check_branch
      %46 = sbr.rel (0) target = $region33
    $region32: #{encoder_block.1} parent=1 // pred_region
      _
    $region33: #{encoder_block.1} parent=1 // pred_fallthru
      _
    // Predicated region
    $region34: #{encoder_block.1} parent=1 // pred_check
      _
    $region35: #{encoder_block.1} parent=1 // pred_check_branch
      %48 = sbr.rel (0) target = $region37
    $region36: #{encoder_block.1} parent=1 // pred_region
      _
    $region37: #{encoder_block.1} parent=1 // pred_fallthru
      _
    // Predicated region
    $region38: #{encoder_block.1} parent=1 // pred_check
      _
    $region39: #{encoder_block.1} parent=1 // pred_check_branch
      %50 = sbr.rel (0) target = $region41
    $region40: #{encoder_block.1} parent=1 // pred_region
      _
    $region41: #{encoder_block.1} parent=1 // pred_fallthru
      _
    // Predicated region
    $region42: #{encoder_block.1} parent=1 // pred_check
      _
    $region43: #{encoder_block.1} parent=1 // pred_check_branch
      %52 = sbr.rel (0) target = $region45
    $region44: #{encoder_block.1} parent=1 // pred_region
      _
    $region45: #{encoder_block.1} parent=1 // pred_fallthru
      _
    // Predicated region
    $region46: #{encoder_block.1} parent=1 // pred_check
      _
    $region47: #{encoder_block.1} parent=1 // pred_check_branch
      %54 = sbr.rel (0) target = $region49
    $region48: #{encoder_block.1} parent=1 // pred_region
      _
    $region49: #{encoder_block.1} parent=1 // pred_fallthru
      _
    // Predicated region
    $region50: #{encoder_block.1} parent=1 // pred_check
      _
    $region51: #{encoder_block.1} parent=1 // pred_check_branch
      %56 = sbr.rel (0) target = $region53
    $region52: #{encoder_block.1} parent=1 // pred_region
      _
    $region53: #{encoder_block.1} parent=1 // pred_fallthru
      _
    // Predicated region
    $region54: #{encoder_block.1} parent=1 // pred_check
      _
    $region55: #{encoder_block.1} parent=1 // pred_check_branch
      %58 = sbr.rel (0) target = $region57
    $region56: #{encoder_block.1} parent=1 // pred_region
      _
    $region57: #{encoder_block.1} parent=1 // pred_fallthru
      _
    // Predicated region
    $region58: #{encoder_block.1} parent=1 // pred_check
      _
    $region59: #{encoder_block.1} parent=1 // pred_check_branch
      %60 = sbr.rel (0) target = $region61
    $region60: #{encoder_block.1} parent=1 // pred_region
      %61 = dma.done [#allocation3], 256
    $region61: #{encoder_block.1} parent=1 // pred_fallthru
      _
    %v62 = vld [vmem:[#allocation2] sm:$0xff]
    %v63 = vld [vmem:[#allocation2 + $0x8] sm:$0xff]
    %v64 = vld [vmem:[%s1] sm:$0x1]
    %v65 = vld [vmem:[%s1 + $0x1] sm:$0x1]
    %v66 = vld [vmem:[%s2] sm:$0x1]
    %v67 = vld [vmem:[%s3] sm:$0x1]
    %vm68 = vcmask 261120
    %v69 = vsel %vm68, %v62, 0.0
    %70 = vadd.xlane.f32.xlu0 %v69
    %v71 = vpop.xlane.xlu0 %70
    %v72 = vsel %vm68, %v63, 0.0
    %73 = vadd.xlane.f32.xlu0 %v72
    %v74 = vpop.xlane.xlu0 %73
    %v75 = vrcp.pop 32.0
    %v76 = vmul.f32 %v71, %v75
    %v77 = vmul.f32 %v74, %v75
    %v78 = vsub.f32 %v62, %v76
    %v79 = vsub.f32 %v63, %v77
    %v80 = vmul.f32 %v78, %v78
    %v81 = vmul.f32 %v79, %v79
    %v82 = vsel %vm68, %v80, 0.0
    %83 = vadd.xlane.f32.xlu0 %v82
    %v84 = vpop.xlane.xlu0 %83
    %v85 = vsel %vm68, %v81, 0.0
    %86 = vadd.xlane.f32.xlu0 %v85
    %v87 = vpop.xlane.xlu0 %86
    %v88 = vrcp.pop 31.0
    %v89 = vmul.f32 %v84, %v88
    %v90 = vmul.f32 %v87, %v88
    %v91 = vrsqrt.pop %v89
    %v92 = vmul.f32 %v89, %v91
    %vm93 = vcmp.eq.f32.partialorder %v89, inf
    %v94 = vsel %vm93, %v89, %v92
    %vm95 = vcmp.eq.f32.partialorder %v89, 0.0
    %v96 = vand.u32 %v89, 2147483648
    %v97 = vsel %vm95, %v96, %v94
    %v98 = vrsqrt.pop %v90
    %v99 = vmul.f32 %v90, %v98
    %vm100 = vcmp.eq.f32.partialorder %v90, inf
    %v101 = vsel %vm100, %v90, %v99
    %vm102 = vcmp.eq.f32.partialorder %v90, 0.0
    %v103 = vand.u32 %v90, 2147483648
    %v104 = vsel %vm102, %v103, %v101
    %v105 = vadd.f32 %v97, 1e-06
    %v106 = vadd.f32 %v104, 1e-06
    %v107 = vrcp.pop %v105
    %v108 = vrcp.pop %v106
    %v110 = vlaneseq
    %v111 = vshrl.u32 %v110, 7
    %v112 = vsub.s32 0, %v111
    %v113 = vrot.slane %v66, %v112
    %v115 = vmul.f32 %v113, %v78
    %v116 = vmul.f32 %v113, %v79
    %v117 = vmul.f32 %v115, %v107
    %v118 = vmul.f32 %v116, %v108
    %v120 = vlaneseq
    %v121 = vshrl.u32 %v120, 7
    %v122 = vsub.s32 0, %v121
    %v123 = vrot.slane %v67, %v122
    %v125 = vadd.f32 %v117, %v123
    %v126 = vadd.f32 %v118, %v123
    %v127 = vld [vmem:[%s4] sm:$0xff]
    %v128 = vld [vmem:[%s4 + $0x8] sm:$0xff]
    %v129 = vld [vmem:[%s4 + $0x10] sm:$0xff]
    %v130 = vld [vmem:[%s4 + $0x18] sm:$0xff]
    %v131 = vld [vmem:[%s5] sm:$0x1]
    %v133 = vlaneseq
    %v134 = vshrl.u32 %v133, 7
    %v135 = vsub.s32 0, %v134
    %v136 = vrot.slane %v131, %v135
    %v139 = vsel %vm68, %v125, 0
    %v142 = vsel %vm68, %v126, 0
    %144 = vmatprep.subr.mxu0 0.0
    %145 = vmatpush1.msra.mxu0 %v127
    %146 = vmatprep.subr.mxu0 0.0
    %147 = vmatpush1.msra.mxu0 %v128
    %148 = vmatprep.subr.mxu0 0.0
    %149 = vmatpush1.msra.mxu0 %v129
    %150 = vmatprep.subr.mxu0 0.0
    %151 = vmatpush1.msra.mxu0 %v130
    %152 = vmatprep.subr.mxu0 0.0
    %153 = vmatpush1.msra.mxu0 0.0
    %154 = vmatprep.subr.mxu0 0.0
    %155 = vmatpush1.msra.mxu0 0.0
    %156 = vmatprep.subr.mxu0 0.0
    %157 = vmatpush1.msra.mxu0 0.0
    %158 = vmatprep.subr.mxu0 0.0
    %159 = vmatpush1.msra.mxu0 0.0
    %160 = vmatprep.subr.mxu0 0.0
    %161 = vmatpush1.msra.mxu0 0.0
    %162 = vmatprep.subr.mxu0 0.0
    %163 = vmatpush1.msra.mxu0 0.0
    %164 = vmatprep.subr.mxu0 0.0
    %165 = vmatpush1.msra.mxu0 0.0
    %166 = vmatprep.subr.mxu0 0.0
    %167 = vmatpush1.msra.mxu0 0.0
    %168 = vmatprep.subr.mxu0 0.0
    %169 = vmatpush1.msra.mxu0 0.0
    %170 = vmatprep.subr.mxu0 0.0
    %171 = vmatpush1.msra.mxu0 0.0
    %172 = vmatprep.subr.mxu0 0.0
    %173 = vmatpush1.msra.mxu0 0.0
    %174 = vmatprep.subr.mxu0 0.0
    %175 = vmatpush1.msra.mxu0 0.0
    %176 = vmatprep.subr.mxu0 0.0
    %177 = vmatpush1.msra.mxu0 0.0
    %178 = vmatprep.subr.mxu0 0.0
    %179 = vmatpush1.msra.mxu0 0.0
    %180 = vmatprep.subr.mxu0 0.0
    %181 = vmatpush1.msra.mxu0 0.0
    %182 = vmatprep.subr.mxu0 0.0
    %183 = vmatpush1.msra.mxu0 0.0
    %184 = vmatprep.subr.mxu0 0.0
    %185 = vmatpush1.msra.mxu0 0.0
    %186 = vmatprep.subr.mxu0 0.0
    %187 = vmatpush1.msra.mxu0 0.0
    %188 = vmatprep.subr.mxu0 0.0
    %189 = vmatpush1.msra.mxu0 0.0
    %190 = vmatprep.subr.mxu0 0.0
    %191 = vmatpush1.msra.mxu0 0.0
    %192 = vmatprep.subr.mxu0 0.0
    %193 = vmatpush1.msra.mxu0 0.0
    %194 = vmatprep.subr.mxu0 0.0
    %195 = vmatpush1.msra.mxu0 0.0
    %196 = vmatprep.subr.mxu0 0.0
    %197 = vmatpush1.msra.mxu0 0.0
    %198 = vmatprep.subr.mxu0 0.0
    %199 = vmatpush1.msra.mxu0 0.0
    %200 = vmatprep.subr.mxu0 0.0
    %201 = vmatpush1.msra.mxu0 0.0
    %202 = vmatprep.subr.mxu0 0.0
    %203 = vmatpush1.msra.mxu0 0.0
    %204 = vmatprep.subr.mxu0 0.0
    %205 = vmatpush1.msra.mxu0 0.0
    %206 = vmatprep.subr.mxu0 0.0
    %207 = vmatpush1.msra.mxu0 0.0
    %208 = vmatprep.mubr.f32.mxu0 0.0
    %209 = vmatmul.mubr.f32.gmra.mrb[0].mxu0 %v139
    %v210 = vpop.f32.mrb[0].mxu0
    %v211 = vadd.f32 %v136, %v210
    %v212 = vpop.f32.mrb[0].mxu0
    %213 = vmatprep.mubr.f32.mxu0 0.0
    %214 = vmatmul.mubr.f32.gmra.mrb[0].mxu0 %v142
    %v215 = vpop.f32.mrb[0].mxu0
    %v216 = vadd.f32 %v136, %v215
    %v217 = vpop.f32.mrb[0].mxu0
    %218 = vdwg.mxu0
    %v219 = vmul.f32 %v211, 0.35355338
    %v220 = vmul.f32 %v216, 0.35355338
    %223 = vrot.lane.b32.xlu0 %v219, 120
    %v224 = vpop.permute.xlu0 %223
    %225 = vrot.lane.b32.xlu0 %v220, 120
    %v226 = vpop.permute.xlu0 %225
    %229 = vrot.lane.b32.xlu0 %v219, 112
    %v230 = vpop.permute.xlu0 %229
    %231 = vrot.lane.b32.xlu0 %v220, 112
    %v232 = vpop.permute.xlu0 %231
    %235 = vrot.lane.b32.xlu0 %v219, 104
    %v236 = vpop.permute.xlu0 %235
    %237 = vrot.lane.b32.xlu0 %v220, 104
    %v238 = vpop.permute.xlu0 %237
    %v241 = vcombine.low %v219, %v230
    %v242 = vcombine.high %v219, %v230
    %v244 = vunpack.c.l.s4 1983009808
    %v245 = vunpack.c.0.s8 %v244
    %v246 = vlaneseq
    %v247 = vshrl.u32 %v246, 7
    %v248 = vsub.s32 %v245, %v247
    %v249 = vrot.slane %v241, %v248
    %v251 = vunpack.c.l.s4 1983009808
    %v252 = vunpack.c.0.s8 %v251
    %v253 = vlaneseq
    %v254 = vshrl.u32 %v253, 7
    %v255 = vsub.s32 %v252, %v254
    %v256 = vrot.slane %v242, %v255
    %v257 = vcombine.low %v224, %v236
    %v258 = vcombine.high %v224, %v236
    %v260 = vunpack.c.l.s4 1983009808
    %v261 = vunpack.c.0.s8 %v260
    %v262 = vlaneseq
    %v263 = vshrl.u32 %v262, 7
    %v264 = vsub.s32 %v261, %v263
    %v265 = vrot.slane %v257, %v264
    %v267 = vunpack.c.l.s4 1983009808
    %v268 = vunpack.c.0.s8 %v267
    %v269 = vlaneseq
    %v270 = vshrl.u32 %v269, 7
    %v271 = vsub.s32 %v268, %v270
    %v272 = vrot.slane %v258, %v271
    %v273 = vcombine.low %v249, %v265
    %v274 = vcombine.high %v249, %v265
    %v276 = vunpack.c.l.s4 1934713408
    %v277 = vunpack.c.0.s8 %v276
    %v278 = vlaneseq
    %v279 = vshrl.u32 %v278, 7
    %v280 = vsub.s32 %v277, %v279
    %v281 = vrot.slane %v273, %v280
    %v283 = vunpack.c.l.s4 1934713408
    %v284 = vunpack.c.0.s8 %v283
    %v285 = vlaneseq
    %v286 = vshrl.u32 %v285, 7
    %v287 = vsub.s32 %v284, %v286
    %v288 = vrot.slane %v274, %v287
    %v289 = vcombine.low %v256, %v272
    %v290 = vcombine.high %v256, %v272
    %v292 = vunpack.c.l.s4 1934713408
    %v293 = vunpack.c.0.s8 %v292
    %v294 = vlaneseq
    %v295 = vshrl.u32 %v294, 7
    %v296 = vsub.s32 %v293, %v295
    %v297 = vrot.slane %v289, %v296
    %v299 = vunpack.c.l.s4 1934713408
    %v300 = vunpack.c.0.s8 %v299
    %v301 = vlaneseq
    %v302 = vshrl.u32 %v301, 7
    %v303 = vsub.s32 %v300, %v302
    %v304 = vrot.slane %v290, %v303
    %v305 = vcombine.high %v281, 0.0
    %v306 = vcombine.high %v288, 0.0
    %v307 = vcombine.high %v297, 0.0
    %v308 = vcombine.high %v304, 0.0
    %v309 = vcombine.low %v220, %v232
    %v310 = vcombine.high %v220, %v232
    %v312 = vunpack.c.l.s4 1983009808
    %v313 = vunpack.c.0.s8 %v312
    %v314 = vlaneseq
    %v315 = vshrl.u32 %v314, 7
    %v316 = vsub.s32 %v313, %v315
    %v317 = vrot.slane %v309, %v316
    %v319 = vunpack.c.l.s4 1983009808
    %v320 = vunpack.c.0.s8 %v319
    %v321 = vlaneseq
    %v322 = vshrl.u32 %v321, 7
    %v323 = vsub.s32 %v320, %v322
    %v324 = vrot.slane %v310, %v323
    %v325 = vcombine.low %v226, %v238
    %v326 = vcombine.high %v226, %v238
    %v328 = vunpack.c.l.s4 1983009808
    %v329 = vunpack.c.0.s8 %v328
    %v330 = vlaneseq
    %v331 = vshrl.u32 %v330, 7
    %v332 = vsub.s32 %v329, %v331
    %v333 = vrot.slane %v325, %v332
    %v335 = vunpack.c.l.s4 1983009808
    %v336 = vunpack.c.0.s8 %v335
    %v337 = vlaneseq
    %v338 = vshrl.u32 %v337, 7
    %v339 = vsub.s32 %v336, %v338
    %v340 = vrot.slane %v326, %v339
    %v341 = vcombine.low %v317, %v333
    %v342 = vcombine.high %v317, %v333
    %v344 = vunpack.c.l.s4 1934713408
    %v345 = vunpack.c.0.s8 %v344
    %v346 = vlaneseq
    %v347 = vshrl.u32 %v346, 7
    %v348 = vsub.s32 %v345, %v347
    %v349 = vrot.slane %v341, %v348
    %v351 = vunpack.c.l.s4 1934713408
    %v352 = vunpack.c.0.s8 %v351
    %v353 = vlaneseq
    %v354 = vshrl.u32 %v353, 7
    %v355 = vsub.s32 %v352, %v354
    %v356 = vrot.slane %v342, %v355
    %v357 = vcombine.low %v324, %v340
    %v358 = vcombine.high %v324, %v340
    %v360 = vunpack.c.l.s4 1934713408
    %v361 = vunpack.c.0.s8 %v360
    %v362 = vlaneseq
    %v363 = vshrl.u32 %v362, 7
    %v364 = vsub.s32 %v361, %v363
    %v365 = vrot.slane %v357, %v364
    %v367 = vunpack.c.l.s4 1934713408
    %v368 = vunpack.c.0.s8 %v367
    %v369 = vlaneseq
    %v370 = vshrl.u32 %v369, 7
    %v371 = vsub.s32 %v368, %v370
    %v372 = vrot.slane %v358, %v371
    %v373 = vcombine.high %v349, 0.0
    %v374 = vcombine.high %v356, 0.0
    %v375 = vcombine.high %v365, 0.0
    %v376 = vcombine.high %v372, 0.0
    %v377 = vcombine.low %v281, %v288
    %v379 = vunpack.c.l.s4 1983009808
    %v380 = vunpack.c.0.s8 %v379
    %v381 = vlaneseq
    %v382 = vshrl.u32 %v381, 7
    %v383 = vsub.s32 %v380, %v382
    %v384 = vrot.slane %v377, %v383
    %v385 = vcombine.low %v305, %v306
    %v387 = vunpack.c.l.s4 1983009808
    %v388 = vunpack.c.0.s8 %v387
    %v389 = vlaneseq
    %v390 = vshrl.u32 %v389, 7
    %v391 = vsub.s32 %v388, %v390
    %v392 = vrot.slane %v385, %v391
    %v393 = vcombine.low %v297, %v304
    %v395 = vunpack.c.l.s4 1983009808
    %v396 = vunpack.c.0.s8 %v395
    %v397 = vlaneseq
    %v398 = vshrl.u32 %v397, 7
    %v399 = vsub.s32 %v396, %v398
    %v400 = vrot.slane %v393, %v399
    %v401 = vcombine.low %v307, %v308
    %v403 = vunpack.c.l.s4 1983009808
    %v404 = vunpack.c.0.s8 %v403
    %v405 = vlaneseq
    %v406 = vshrl.u32 %v405, 7
    %v407 = vsub.s32 %v404, %v406
    %v408 = vrot.slane %v401, %v407
    %v409 = vcombine.low %v384, %v392
    %v410 = vcombine.high %v384, %v392
    %v412 = vunpack.c.l.s4 1934713408
    %v413 = vunpack.c.0.s8 %v412
    %v414 = vlaneseq
    %v415 = vshrl.u32 %v414, 7
    %v416 = vsub.s32 %v413, %v415
    %v417 = vrot.slane %v409, %v416
    %v419 = vunpack.c.l.s4 1934713408
    %v420 = vunpack.c.0.s8 %v419
    %v421 = vlaneseq
    %v422 = vshrl.u32 %v421, 7
    %v423 = vsub.s32 %v420, %v422
    %v424 = vrot.slane %v410, %v423
    %v425 = vcombine.low %v400, %v408
    %v426 = vcombine.high %v400, %v408
    %v428 = vunpack.c.l.s4 1934713408
    %v429 = vunpack.c.0.s8 %v428
    %v430 = vlaneseq
    %v431 = vshrl.u32 %v430, 7
    %v432 = vsub.s32 %v429, %v431
    %v433 = vrot.slane %v425, %v432
    %v435 = vunpack.c.l.s4 1934713408
    %v436 = vunpack.c.0.s8 %v435
    %v437 = vlaneseq
    %v438 = vshrl.u32 %v437, 7
    %v439 = vsub.s32 %v436, %v438
    %v440 = vrot.slane %v426, %v439
    %v441 = vcombine.low %v417, %v433
    %v442 = vcombine.high %v417, %v433
    %v443 = vcombine.low %v424, %v440
    %v444 = vcombine.high %v424, %v440
    %v445 = vcombine.low %v349, %v356
    %v447 = vunpack.c.l.s4 1983009808
    %v448 = vunpack.c.0.s8 %v447
    %v449 = vlaneseq
    %v450 = vshrl.u32 %v449, 7
    %v451 = vsub.s32 %v448, %v450
    %v452 = vrot.slane %v445, %v451
    %v453 = vcombine.low %v373, %v374
    %v455 = vunpack.c.l.s4 1983009808
    %v456 = vunpack.c.0.s8 %v455
    %v457 = vlaneseq
    %v458 = vshrl.u32 %v457, 7
    %v459 = vsub.s32 %v456, %v458
    %v460 = vrot.slane %v453, %v459
    %v461 = vcombine.low %v365, %v372
    %v463 = vunpack.c.l.s4 1983009808
    %v464 = vunpack.c.0.s8 %v463
    %v465 = vlaneseq
    %v466 = vshrl.u32 %v465, 7
    %v467 = vsub.s32 %v464, %v466
    %v468 = vrot.slane %v461, %v467
    %v469 = vcombine.low %v375, %v376
    %v471 = vunpack.c.l.s4 1983009808
    %v472 = vunpack.c.0.s8 %v471
    %v473 = vlaneseq
    %v474 = vshrl.u32 %v473, 7
    %v475 = vsub.s32 %v472, %v474
    %v476 = vrot.slane %v469, %v475
    %v477 = vcombine.low %v452, %v460
    %v478 = vcombine.high %v452, %v460
    %v480 = vunpack.c.l.s4 1934713408
    %v481 = vunpack.c.0.s8 %v480
    %v482 = vlaneseq
    %v483 = vshrl.u32 %v482, 7
    %v484 = vsub.s32 %v481, %v483
    %v485 = vrot.slane %v477, %v484
    %v487 = vunpack.c.l.s4 1934713408
    %v488 = vunpack.c.0.s8 %v487
    %v489 = vlaneseq
    %v490 = vshrl.u32 %v489, 7
    %v491 = vsub.s32 %v488, %v490
    %v492 = vrot.slane %v478, %v491
    %v493 = vcombine.low %v468, %v476
    %v494 = vcombine.high %v468, %v476
    %v496 = vunpack.c.l.s4 1934713408
    %v497 = vunpack.c.0.s8 %v496
    %v498 = vlaneseq
    %v499 = vshrl.u32 %v498, 7
    %v500 = vsub.s32 %v497, %v499
    %v501 = vrot.slane %v493, %v500
    %v503 = vunpack.c.l.s4 1934713408
    %v504 = vunpack.c.0.s8 %v503
    %v505 = vlaneseq
    %v506 = vshrl.u32 %v505, 7
    %v507 = vsub.s32 %v504, %v506
    %v508 = vrot.slane %v494, %v507
    %v509 = vcombine.low %v485, %v501
    %v510 = vcombine.high %v485, %v501
    %v511 = vcombine.low %v492, %v508
    %v512 = vcombine.high %v492, %v508
    %515 = vrot.lane.b32.xlu0 %v211, 120
    %v516 = vpop.permute.xlu0 %515
    %517 = vrot.lane.b32.xlu0 %v216, 120
    %v518 = vpop.permute.xlu0 %517
    %519 = vrot.lane.b32.xlu0 %v211, 112
    %v520 = vpop.permute.xlu0 %519
    %521 = vrot.lane.b32.xlu0 %v216, 112
    %v522 = vpop.permute.xlu0 %521
    %523 = vrot.lane.b32.xlu0 %v211, 104
    %v524 = vpop.permute.xlu0 %523
    %525 = vrot.lane.b32.xlu0 %v216, 104
    %v526 = vpop.permute.xlu0 %525
    %527 = vrot.lane.b32.xlu0 %v211, 96
    %v528 = vpop.permute.xlu0 %527
    %529 = vrot.lane.b32.xlu0 %v216, 96
    %v530 = vpop.permute.xlu0 %529
    %531 = vrot.lane.b32.xlu0 %v516, 96
    %v532 = vpop.permute.xlu0 %531
    %533 = vrot.lane.b32.xlu0 %v518, 96
    %v534 = vpop.permute.xlu0 %533
    %535 = vrot.lane.b32.xlu0 %v520, 96
    %v536 = vpop.permute.xlu0 %535
    %537 = vrot.lane.b32.xlu0 %v522, 96
    %v538 = vpop.permute.xlu0 %537
    %539 = vrot.lane.b32.xlu0 %v524, 96
    %v540 = vpop.permute.xlu0 %539
    %541 = vrot.lane.b32.xlu0 %v526, 96
    %v542 = vpop.permute.xlu0 %541
    %v551 = vcombine.low %v528, %v536
    %v552 = vcombine.high %v528, %v536
    %v554 = vunpack.c.l.s4 1983009808
    %v555 = vunpack.c.0.s8 %v554
    %v556 = vlaneseq
    %v557 = vshrl.u32 %v556, 7
    %v558 = vsub.s32 %v555, %v557
    %v559 = vrot.slane %v551, %v558
    %v561 = vunpack.c.l.s4 1983009808
    %v562 = vunpack.c.0.s8 %v561
    %v563 = vlaneseq
    %v564 = vshrl.u32 %v563, 7
    %v565 = vsub.s32 %v562, %v564
    %v566 = vrot.slane %v552, %v565
    %v567 = vcombine.low %v532, %v540
    %v568 = vcombine.high %v532, %v540
    %v570 = vunpack.c.l.s4 1983009808
    %v571 = vunpack.c.0.s8 %v570
    %v572 = vlaneseq
    %v573 = vshrl.u32 %v572, 7
    %v574 = vsub.s32 %v571, %v573
    %v575 = vrot.slane %v567, %v574
    %v577 = vunpack.c.l.s4 1983009808
    %v578 = vunpack.c.0.s8 %v577
    %v579 = vlaneseq
    %v580 = vshrl.u32 %v579, 7
    %v581 = vsub.s32 %v578, %v580
    %v582 = vrot.slane %v568, %v581
    %v583 = vcombine.low %v559, %v575
    %v584 = vcombine.high %v559, %v575
    %v586 = vunpack.c.l.s4 1934713408
    %v587 = vunpack.c.0.s8 %v586
    %v588 = vlaneseq
    %v589 = vshrl.u32 %v588, 7
    %v590 = vsub.s32 %v587, %v589
    %v591 = vrot.slane %v583, %v590
    %v593 = vunpack.c.l.s4 1934713408
    %v594 = vunpack.c.0.s8 %v593
    %v595 = vlaneseq
    %v596 = vshrl.u32 %v595, 7
    %v597 = vsub.s32 %v594, %v596
    %v598 = vrot.slane %v584, %v597
    %v599 = vcombine.low %v566, %v582
    %v600 = vcombine.high %v566, %v582
    %v602 = vunpack.c.l.s4 1934713408
    %v603 = vunpack.c.0.s8 %v602
    %v604 = vlaneseq
    %v605 = vshrl.u32 %v604, 7
    %v606 = vsub.s32 %v603, %v605
    %v607 = vrot.slane %v599, %v606
    %v609 = vunpack.c.l.s4 1934713408
    %v610 = vunpack.c.0.s8 %v609
    %v611 = vlaneseq
    %v612 = vshrl.u32 %v611, 7
    %v613 = vsub.s32 %v610, %v612
    %v614 = vrot.slane %v600, %v613
    %v615 = vcombine.high %v591, 0.0
    %v616 = vcombine.high %v598, 0.0
    %v617 = vcombine.high %v607, 0.0
    %v618 = vcombine.high %v614, 0.0
    %v619 = vcombine.low %v530, %v538
    %v620 = vcombine.high %v530, %v538
    %v622 = vunpack.c.l.s4 1983009808
    %v623 = vunpack.c.0.s8 %v622
    %v624 = vlaneseq
    %v625 = vshrl.u32 %v624, 7
    %v626 = vsub.s32 %v623, %v625
    %v627 = vrot.slane %v619, %v626
    %v629 = vunpack.c.l.s4 1983009808
    %v630 = vunpack.c.0.s8 %v629
    %v631 = vlaneseq
    %v632 = vshrl.u32 %v631, 7
    %v633 = vsub.s32 %v630, %v632
    %v634 = vrot.slane %v620, %v633
    %v635 = vcombine.low %v534, %v542
    %v636 = vcombine.high %v534, %v542
    %v638 = vunpack.c.l.s4 1983009808
    %v639 = vunpack.c.0.s8 %v638
    %v640 = vlaneseq
    %v641 = vshrl.u32 %v640, 7
    %v642 = vsub.s32 %v639, %v641
    %v643 = vrot.slane %v635, %v642
    %v645 = vunpack.c.l.s4 1983009808
    %v646 = vunpack.c.0.s8 %v645
    %v647 = vlaneseq
    %v648 = vshrl.u32 %v647, 7
    %v649 = vsub.s32 %v646, %v648
    %v650 = vrot.slane %v636, %v649
    %v651 = vcombine.low %v627, %v643
    %v652 = vcombine.high %v627, %v643
    %v654 = vunpack.c.l.s4 1934713408
    %v655 = vunpack.c.0.s8 %v654
    %v656 = vlaneseq
    %v657 = vshrl.u32 %v656, 7
    %v658 = vsub.s32 %v655, %v657
    %v659 = vrot.slane %v651, %v658
    %v661 = vunpack.c.l.s4 1934713408
    %v662 = vunpack.c.0.s8 %v661
    %v663 = vlaneseq
    %v664 = vshrl.u32 %v663, 7
    %v665 = vsub.s32 %v662, %v664
    %v666 = vrot.slane %v652, %v665
    %v667 = vcombine.low %v634, %v650
    %v668 = vcombine.high %v634, %v650
    %v670 = vunpack.c.l.s4 1934713408
    %v671 = vunpack.c.0.s8 %v670
    %v672 = vlaneseq
    %v673 = vshrl.u32 %v672, 7
    %v674 = vsub.s32 %v671, %v673
    %v675 = vrot.slane %v667, %v674
    %v677 = vunpack.c.l.s4 1934713408
    %v678 = vunpack.c.0.s8 %v677
    %v679 = vlaneseq
    %v680 = vshrl.u32 %v679, 7
    %v681 = vsub.s32 %v678, %v680
    %v682 = vrot.slane %v668, %v681
    %v683 = vcombine.high %v659, 0.0
    %v684 = vcombine.high %v666, 0.0
    %v685 = vcombine.high %v675, 0.0
    %v686 = vcombine.high %v682, 0.0
    %v687 = vcombine.low %v591, %v598
    %v689 = vunpack.c.l.s4 1983009808
    %v690 = vunpack.c.0.s8 %v689
    %v691 = vlaneseq
    %v692 = vshrl.u32 %v691, 7
    %v693 = vsub.s32 %v690, %v692
    %v694 = vrot.slane %v687, %v693
    %v695 = vcombine.low %v615, %v616
    %v697 = vunpack.c.l.s4 1983009808
    %v698 = vunpack.c.0.s8 %v697
    %v699 = vlaneseq
    %v700 = vshrl.u32 %v699, 7
    %v701 = vsub.s32 %v698, %v700
    %v702 = vrot.slane %v695, %v701
    %v703 = vcombine.low %v607, %v614
    %v705 = vunpack.c.l.s4 1983009808
    %v706 = vunpack.c.0.s8 %v705
    %v707 = vlaneseq
    %v708 = vshrl.u32 %v707, 7
    %v709 = vsub.s32 %v706, %v708
    %v710 = vrot.slane %v703, %v709
    %v711 = vcombine.low %v617, %v618
    %v713 = vunpack.c.l.s4 1983009808
    %v714 = vunpack.c.0.s8 %v713
    %v715 = vlaneseq
    %v716 = vshrl.u32 %v715, 7
    %v717 = vsub.s32 %v714, %v716
    %v718 = vrot.slane %v711, %v717
    %v719 = vcombine.low %v694, %v702
    %v720 = vcombine.high %v694, %v702
    %v722 = vunpack.c.l.s4 1934713408
    %v723 = vunpack.c.0.s8 %v722
    %v724 = vlaneseq
    %v725 = vshrl.u32 %v724, 7
    %v726 = vsub.s32 %v723, %v725
    %v727 = vrot.slane %v719, %v726
    %v729 = vunpack.c.l.s4 1934713408
    %v730 = vunpack.c.0.s8 %v729
    %v731 = vlaneseq
    %v732 = vshrl.u32 %v731, 7
    %v733 = vsub.s32 %v730, %v732
    %v734 = vrot.slane %v720, %v733
    %v735 = vcombine.low %v710, %v718
    %v736 = vcombine.high %v710, %v718
    %v738 = vunpack.c.l.s4 1934713408
    %v739 = vunpack.c.0.s8 %v738
    %v740 = vlaneseq
    %v741 = vshrl.u32 %v740, 7
    %v742 = vsub.s32 %v739, %v741
    %v743 = vrot.slane %v735, %v742
    %v745 = vunpack.c.l.s4 1934713408
    %v746 = vunpack.c.0.s8 %v745
    %v747 = vlaneseq
    %v748 = vshrl.u32 %v747, 7
    %v749 = vsub.s32 %v746, %v748
    %v750 = vrot.slane %v736, %v749
    %v751 = vcombine.low %v727, %v743
    %v752 = vcombine.high %v727, %v743
    %v753 = vcombine.low %v734, %v750
    %v754 = vcombine.high %v734, %v750
    %v755 = vcombine.low %v659, %v666
    %v757 = vunpack.c.l.s4 1983009808
    %v758 = vunpack.c.0.s8 %v757
    %v759 = vlaneseq
    %v760 = vshrl.u32 %v759, 7
    %v761 = vsub.s32 %v758, %v760
    %v762 = vrot.slane %v755, %v761
    %v763 = vcombine.low %v683, %v684
    %v765 = vunpack.c.l.s4 1983009808
    %v766 = vunpack.c.0.s8 %v765
    %v767 = vlaneseq
    %v768 = vshrl.u32 %v767, 7
    %v769 = vsub.s32 %v766, %v768
    %v770 = vrot.slane %v763, %v769
    %v771 = vcombine.low %v675, %v682
    %v773 = vunpack.c.l.s4 1983009808
    %v774 = vunpack.c.0.s8 %v773
    %v775 = vlaneseq
    %v776 = vshrl.u32 %v775, 7
    %v777 = vsub.s32 %v774, %v776
    %v778 = vrot.slane %v771, %v777
    %v779 = vcombine.low %v685, %v686
    %v781 = vunpack.c.l.s4 1983009808
    %v782 = vunpack.c.0.s8 %v781
    %v783 = vlaneseq
    %v784 = vshrl.u32 %v783, 7
    %v785 = vsub.s32 %v782, %v784
    %v786 = vrot.slane %v779, %v785
    %v787 = vcombine.low %v762, %v770
    %v788 = vcombine.high %v762, %v770
    %v790 = vunpack.c.l.s4 1934713408
    %v791 = vunpack.c.0.s8 %v790
    %v792 = vlaneseq
    %v793 = vshrl.u32 %v792, 7
    %v794 = vsub.s32 %v791, %v793
    %v795 = vrot.slane %v787, %v794
    %v797 = vunpack.c.l.s4 1934713408
    %v798 = vunpack.c.0.s8 %v797
    %v799 = vlaneseq
    %v800 = vshrl.u32 %v799, 7
    %v801 = vsub.s32 %v798, %v800
    %v802 = vrot.slane %v788, %v801
    %v803 = vcombine.low %v778, %v786
    %v804 = vcombine.high %v778, %v786
    %v806 = vunpack.c.l.s4 1934713408
    %v807 = vunpack.c.0.s8 %v806
    %v808 = vlaneseq
    %v809 = vshrl.u32 %v808, 7
    %v810 = vsub.s32 %v807, %v809
    %v811 = vrot.slane %v803, %v810
    %v813 = vunpack.c.l.s4 1934713408
    %v814 = vunpack.c.0.s8 %v813
    %v815 = vlaneseq
    %v816 = vshrl.u32 %v815, 7
    %v817 = vsub.s32 %v814, %v816
    %v818 = vrot.slane %v804, %v817
    %v819 = vcombine.low %v795, %v811
    %v820 = vcombine.high %v795, %v811
    %v821 = vcombine.low %v802, %v818
    %v822 = vcombine.high %v802, %v818
    %823 = vrot.lane.b32.xlu0 %v211, 64
    %v824 = vpop.permute.xlu0 %823
    %825 = vrot.lane.b32.xlu0 %v216, 64
    %v826 = vpop.permute.xlu0 %825
    %827 = vrot.lane.b32.xlu0 %v516, 64
    %v828 = vpop.permute.xlu0 %827
    %829 = vrot.lane.b32.xlu0 %v518, 64
    %v830 = vpop.permute.xlu0 %829
    %831 = vrot.lane.b32.xlu0 %v520, 64
    %v832 = vpop.permute.xlu0 %831
    %833 = vrot.lane.b32.xlu0 %v522, 64
    %v834 = vpop.permute.xlu0 %833
    %835 = vrot.lane.b32.xlu0 %v524, 64
    %v836 = vpop.permute.xlu0 %835
    %837 = vrot.lane.b32.xlu0 %v526, 64
    %v838 = vpop.permute.xlu0 %837
    %v847 = vcombine.low %v824, %v832
    %v848 = vcombine.high %v824, %v832
    %v850 = vunpack.c.l.s4 1983009808
    %v851 = vunpack.c.0.s8 %v850
    %v852 = vlaneseq
    %v853 = vshrl.u32 %v852, 7
    %v854 = vsub.s32 %v851, %v853
    %v855 = vrot.slane %v847, %v854
    %v857 = vunpack.c.l.s4 1983009808
    %v858 = vunpack.c.0.s8 %v857
    %v859 = vlaneseq
    %v860 = vshrl.u32 %v859, 7
    %v861 = vsub.s32 %v858, %v860
    %v862 = vrot.slane %v848, %v861
    %v863 = vcombine.low %v828, %v836
    %v864 = vcombine.high %v828, %v836
    %v866 = vunpack.c.l.s4 1983009808
    %v867 = vunpack.c.0.s8 %v866
    %v868 = vlaneseq
    %v869 = vshrl.u32 %v868, 7
    %v870 = vsub.s32 %v867, %v869
    %v871 = vrot.slane %v863, %v870
    %v873 = vunpack.c.l.s4 1983009808
    %v874 = vunpack.c.0.s8 %v873
    %v875 = vlaneseq
    %v876 = vshrl.u32 %v875, 7
    %v877 = vsub.s32 %v874, %v876
    %v878 = vrot.slane %v864, %v877
    %v879 = vcombine.low %v855, %v871
    %v880 = vcombine.high %v855, %v871
    %v882 = vunpack.c.l.s4 1934713408
    %v883 = vunpack.c.0.s8 %v882
    %v884 = vlaneseq
    %v885 = vshrl.u32 %v884, 7
    %v886 = vsub.s32 %v883, %v885
    %v887 = vrot.slane %v879, %v886
    %v889 = vunpack.c.l.s4 1934713408
    %v890 = vunpack.c.0.s8 %v889
    %v891 = vlaneseq
    %v892 = vshrl.u32 %v891, 7
    %v893 = vsub.s32 %v890, %v892
    %v894 = vrot.slane %v880, %v893
    %v895 = vcombine.low %v862, %v878
    %v896 = vcombine.high %v862, %v878
    %v898 = vunpack.c.l.s4 1934713408
    %v899 = vunpack.c.0.s8 %v898
    %v900 = vlaneseq
    %v901 = vshrl.u32 %v900, 7
    %v902 = vsub.s32 %v899, %v901
    %v903 = vrot.slane %v895, %v902
    %v905 = vunpack.c.l.s4 1934713408
    %v906 = vunpack.c.0.s8 %v905
    %v907 = vlaneseq
    %v908 = vshrl.u32 %v907, 7
    %v909 = vsub.s32 %v906, %v908
    %v910 = vrot.slane %v896, %v909
    %v911 = vcombine.high %v887, 0.0
    %v912 = vcombine.high %v894, 0.0
    %v913 = vcombine.high %v903, 0.0
    %v914 = vcombine.high %v910, 0.0
    %v915 = vcombine.low %v826, %v834
    %v916 = vcombine.high %v826, %v834
    %v918 = vunpack.c.l.s4 1983009808
    %v919 = vunpack.c.0.s8 %v918
    %v920 = vlaneseq
    %v921 = vshrl.u32 %v920, 7
    %v922 = vsub.s32 %v919, %v921
    %v923 = vrot.slane %v915, %v922
    %v925 = vunpack.c.l.s4 1983009808
    %v926 = vunpack.c.0.s8 %v925
    %v927 = vlaneseq
    %v928 = vshrl.u32 %v927, 7
    %v929 = vsub.s32 %v926, %v928
    %v930 = vrot.slane %v916, %v929
    %v931 = vcombine.low %v830, %v838
    %v932 = vcombine.high %v830, %v838
    %v934 = vunpack.c.l.s4 1983009808
    %v935 = vunpack.c.0.s8 %v934
    %v936 = vlaneseq
    %v937 = vshrl.u32 %v936, 7
    %v938 = vsub.s32 %v935, %v937
    %v939 = vrot.slane %v931, %v938
    %v941 = vunpack.c.l.s4 1983009808
    %v942 = vunpack.c.0.s8 %v941
    %v943 = vlaneseq
    %v944 = vshrl.u32 %v943, 7
    %v945 = vsub.s32 %v942, %v944
    %v946 = vrot.slane %v932, %v945
    %v947 = vcombine.low %v923, %v939
    %v948 = vcombine.high %v923, %v939
    %v950 = vunpack.c.l.s4 1934713408
    %v951 = vunpack.c.0.s8 %v950
    %v952 = vlaneseq
    %v953 = vshrl.u32 %v952, 7
    %v954 = vsub.s32 %v951, %v953
    %v955 = vrot.slane %v947, %v954
    %v957 = vunpack.c.l.s4 1934713408
    %v958 = vunpack.c.0.s8 %v957
    %v959 = vlaneseq
    %v960 = vshrl.u32 %v959, 7
    %v961 = vsub.s32 %v958, %v960
    %v962 = vrot.slane %v948, %v961
    %v963 = vcombine.low %v930, %v946
    %v964 = vcombine.high %v930, %v946
    %v966 = vunpack.c.l.s4 1934713408
    %v967 = vunpack.c.0.s8 %v966
    %v968 = vlaneseq
    %v969 = vshrl.u32 %v968, 7
    %v970 = vsub.s32 %v967, %v969
    %v971 = vrot.slane %v963, %v970
    %v973 = vunpack.c.l.s4 1934713408
    %v974 = vunpack.c.0.s8 %v973
    %v975 = vlaneseq
    %v976 = vshrl.u32 %v975, 7
    %v977 = vsub.s32 %v974, %v976
    %v978 = vrot.slane %v964, %v977
    %v979 = vcombine.high %v955, 0.0
    %v980 = vcombine.high %v962, 0.0
    %v981 = vcombine.high %v971, 0.0
    %v982 = vcombine.high %v978, 0.0
    %v983 = vcombine.low %v887, %v894
    %v985 = vunpack.c.l.s4 1983009808
    %v986 = vunpack.c.0.s8 %v985
    %v987 = vlaneseq
    %v988 = vshrl.u32 %v987, 7
    %v989 = vsub.s32 %v986, %v988
    %v990 = vrot.slane %v983, %v989
    %v991 = vcombine.low %v911, %v912
    %v993 = vunpack.c.l.s4 1983009808
    %v994 = vunpack.c.0.s8 %v993
    %v995 = vlaneseq
    %v996 = vshrl.u32 %v995, 7
    %v997 = vsub.s32 %v994, %v996
    %v998 = vrot.slane %v991, %v997
    %v999 = vcombine.low %v903, %v910
    %v1001 = vunpack.c.l.s4 1983009808
    %v1002 = vunpack.c.0.s8 %v1001
    %v1003 = vlaneseq
    %v1004 = vshrl.u32 %v1003, 7
    %v1005 = vsub.s32 %v1002, %v1004
    %v1006 = vrot.slane %v999, %v1005
    %v1007 = vcombine.low %v913, %v914
    %v1009 = vunpack.c.l.s4 1983009808
    %v1010 = vunpack.c.0.s8 %v1009
    %v1011 = vlaneseq
    %v1012 = vshrl.u32 %v1011, 7
    %v1013 = vsub.s32 %v1010, %v1012
    %v1014 = vrot.slane %v1007, %v1013
    %v1015 = vcombine.low %v990, %v998
    %v1016 = vcombine.high %v990, %v998
    %v1018 = vunpack.c.l.s4 1934713408
    %v1019 = vunpack.c.0.s8 %v1018
    %v1020 = vlaneseq
    %v1021 = vshrl.u32 %v1020, 7
    %v1022 = vsub.s32 %v1019, %v1021
    %v1023 = vrot.slane %v1015, %v1022
    %v1025 = vunpack.c.l.s4 1934713408
    %v1026 = vunpack.c.0.s8 %v1025
    %v1027 = vlaneseq
    %v1028 = vshrl.u32 %v1027, 7
    %v1029 = vsub.s32 %v1026, %v1028
    %v1030 = vrot.slane %v1016, %v1029
    %v1031 = vcombine.low %v1006, %v1014
    %v1032 = vcombine.high %v1006, %v1014
    %v1034 = vunpack.c.l.s4 1934713408
    %v1035 = vunpack.c.0.s8 %v1034
    %v1036 = vlaneseq
    %v1037 = vshrl.u32 %v1036, 7
    %v1038 = vsub.s32 %v1035, %v1037
    %v1039 = vrot.slane %v1031, %v1038
    %v1041 = vunpack.c.l.s4 1934713408
    %v1042 = vunpack.c.0.s8 %v1041
    %v1043 = vlaneseq
    %v1044 = vshrl.u32 %v1043, 7
    %v1045 = vsub.s32 %v1042, %v1044
    %v1046 = vrot.slane %v1032, %v1045
    %v1047 = vcombine.low %v1023, %v1039
    %v1048 = vcombine.high %v1023, %v1039
    %v1049 = vcombine.low %v1030, %v1046
    %v1050 = vcombine.high %v1030, %v1046
    %v1051 = vcombine.low %v955, %v962
    %v1053 = vunpack.c.l.s4 1983009808
    %v1054 = vunpack.c.0.s8 %v1053
    %v1055 = vlaneseq
    %v1056 = vshrl.u32 %v1055, 7
    %v1057 = vsub.s32 %v1054, %v1056
    %v1058 = vrot.slane %v1051, %v1057
    %v1059 = vcombine.low %v979, %v980
    %v1061 = vunpack.c.l.s4 1983009808
    %v1062 = vunpack.c.0.s8 %v1061
    %v1063 = vlaneseq
    %v1064 = vshrl.u32 %v1063, 7
    %v1065 = vsub.s32 %v1062, %v1064
    %v1066 = vrot.slane %v1059, %v1065
    %v1067 = vcombine.low %v971, %v978
    %v1069 = vunpack.c.l.s4 1983009808
    %v1070 = vunpack.c.0.s8 %v1069
    %v1071 = vlaneseq
    %v1072 = vshrl.u32 %v1071, 7
    %v1073 = vsub.s32 %v1070, %v1072
    %v1074 = vrot.slane %v1067, %v1073
    %v1075 = vcombine.low %v981, %v982
    %v1077 = vunpack.c.l.s4 1983009808
    %v1078 = vunpack.c.0.s8 %v1077
    %v1079 = vlaneseq
    %v1080 = vshrl.u32 %v1079, 7
    %v1081 = vsub.s32 %v1078, %v1080
    %v1082 = vrot.slane %v1075, %v1081
    %v1083 = vcombine.low %v1058, %v1066
    %v1084 = vcombine.high %v1058, %v1066
    %v1086 = vunpack.c.l.s4 1934713408
    %v1087 = vunpack.c.0.s8 %v1086
    %v1088 = vlaneseq
    %v1089 = vshrl.u32 %v1088, 7
    %v1090 = vsub.s32 %v1087, %v1089
    %v1091 = vrot.slane %v1083, %v1090
    %v1093 = vunpack.c.l.s4 1934713408
    %v1094 = vunpack.c.0.s8 %v1093
    %v1095 = vlaneseq
    %v1096 = vshrl.u32 %v1095, 7
    %v1097 = vsub.s32 %v1094, %v1096
    %v1098 = vrot.slane %v1084, %v1097
    %v1099 = vcombine.low %v1074, %v1082
    %v1100 = vcombine.high %v1074, %v1082
    %v1102 = vunpack.c.l.s4 1934713408
    %v1103 = vunpack.c.0.s8 %v1102
    %v1104 = vlaneseq
    %v1105 = vshrl.u32 %v1104, 7
    %v1106 = vsub.s32 %v1103, %v1105
    %v1107 = vrot.slane %v1099, %v1106
    %v1109 = vunpack.c.l.s4 1934713408
    %v1110 = vunpack.c.0.s8 %v1109
    %v1111 = vlaneseq
    %v1112 = vshrl.u32 %v1111, 7
    %v1113 = vsub.s32 %v1110, %v1112
    %v1114 = vrot.slane %v1100, %v1113
    %v1115 = vcombine.low %v1091, %v1107
    %v1116 = vcombine.high %v1091, %v1107
    %v1117 = vcombine.low %v1098, %v1114
    %v1118 = vcombine.high %v1098, %v1114
    %vm1119 = vcmask 64512
    %v1121 = vsel %vm1119, %v441, 0
    %v1124 = vsel %vm1119, %v751, 0
    %1126 = vmatprep.subr.mxu0 0.0
    %1127 = vmatpush1.xpose.msra.mxu0 %v1124
    %1128 = vmatprep.subr.mxu0 0.0
    %1129 = vmatpush1.xpose.msra.mxu0 0.0
    %1130 = vmatprep.subr.mxu0 0.0
    %1131 = vmatpush1.xpose.msra.mxu0 0.0
    %1132 = vmatprep.subr.mxu0 0.0
    %1133 = vmatpush1.xpose.msra.mxu0 0.0
    %1134 = vmatprep.subr.mxu0 0.0
    %1135 = vmatpush1.xpose.msra.mxu0 0.0
    %1136 = vmatprep.subr.mxu0 0.0
    %1137 = vmatpush1.xpose.msra.mxu0 0.0
    %1138 = vmatprep.subr.mxu0 0.0
    %1139 = vmatpush1.xpose.msra.mxu0 0.0
    %1140 = vmatprep.subr.mxu0 0.0
    %1141 = vmatpush1.xpose.msra.mxu0 0.0
    %1142 = vmatprep.subr.mxu0 0.0
    %1143 = vmatpush1.xpose.msra.mxu0 0.0
    %1144 = vmatprep.subr.mxu0 0.0
    %1145 = vmatpush1.xpose.msra.mxu0 0.0
    %1146 = vmatprep.subr.mxu0 0.0
    %1147 = vmatpush1.xpose.msra.mxu0 0.0
    %1148 = vmatprep.subr.mxu0 0.0
    %1149 = vmatpush1.xpose.msra.mxu0 0.0
    %1150 = vmatprep.subr.mxu0 0.0
    %1151 = vmatpush1.xpose.msra.mxu0 0.0
    %1152 = vmatprep.subr.mxu0 0.0
    %1153 = vmatpush1.xpose.msra.mxu0 0.0
    %1154 = vmatprep.subr.mxu0 0.0
    %1155 = vmatpush1.xpose.msra.mxu0 0.0
    %1156 = vmatprep.subr.mxu0 0.0
    %1157 = vmatpush1.xpose.msra.mxu0 0.0
    %1158 = vmatprep.subr.mxu0 0.0
    %1159 = vmatpush1.xpose.msra.mxu0 0.0
    %1160 = vmatprep.subr.mxu0 0.0
    %1161 = vmatpush1.xpose.msra.mxu0 0.0
    %1162 = vmatprep.subr.mxu0 0.0
    %1163 = vmatpush1.xpose.msra.mxu0 0.0
    %1164 = vmatprep.subr.mxu0 0.0
    %1165 = vmatpush1.xpose.msra.mxu0 0.0
    %1166 = vmatprep.subr.mxu0 0.0
    %1167 = vmatpush1.xpose.msra.mxu0 0.0
    %1168 = vmatprep.subr.mxu0 0.0
    %1169 = vmatpush1.xpose.msra.mxu0 0.0
    %1170 = vmatprep.subr.mxu0 0.0
    %1171 = vmatpush1.xpose.msra.mxu0 0.0
    %1172 = vmatprep.subr.mxu0 0.0
    %1173 = vmatpush1.xpose.msra.mxu0 0.0
    %1174 = vmatprep.subr.mxu0 0.0
    %1175 = vmatpush1.xpose.msra.mxu0 0.0
    %1176 = vmatprep.subr.mxu0 0.0
    %1177 = vmatpush1.xpose.msra.mxu0 0.0
    %1178 = vmatprep.subr.mxu0 0.0
    %1179 = vmatpush1.xpose.msra.mxu0 0.0
    %1180 = vmatprep.subr.mxu0 0.0
    %1181 = vmatpush1.xpose.msra.mxu0 0.0
    %1182 = vmatprep.subr.mxu0 0.0
    %1183 = vmatpush1.xpose.msra.mxu0 0.0
    %1184 = vmatprep.subr.mxu0 0.0
    %1185 = vmatpush1.xpose.msra.mxu0 0.0
    %1186 = vmatprep.subr.mxu0 0.0
    %1187 = vmatpush1.xpose.msra.mxu0 0.0
    %1188 = vmatprep.subr.mxu0 0.0
    %1189 = vmatpush1.xpose.msra.mxu0 0.0
    %1190 = vmatprep.mubr.f32.mxu0 0.0
    %1191 = vmatmul.mubr.f32.gmra.mrb[0].mxu0 %v1121
    %v1192 = vpop.f32.mrb[0].mxu0
    %v1193 = vadd.f32 0.0, %v1192
    %v1194 = vpop.f32.mrb[0].mxu0
    %1195 = vdwg.mxu0
    %v1197 = vsel %vm1119, %v442, 0
    %v1200 = vsel %vm1119, %v752, 0
    %1202 = vmatprep.subr.mxu0 0.0
    %1203 = vmatpush1.xpose.msra.mxu0 %v1200
    %1204 = vmatprep.subr.mxu0 0.0
    %1205 = vmatpush1.xpose.msra.mxu0 0.0
    %1206 = vmatprep.subr.mxu0 0.0
    %1207 = vmatpush1.xpose.msra.mxu0 0.0
    %1208 = vmatprep.subr.mxu0 0.0
    %1209 = vmatpush1.xpose.msra.mxu0 0.0
    %1210 = vmatprep.subr.mxu0 0.0
    %1211 = vmatpush1.xpose.msra.mxu0 0.0
    %1212 = vmatprep.subr.mxu0 0.0
    %1213 = vmatpush1.xpose.msra.mxu0 0.0
    %1214 = vmatprep.subr.mxu0 0.0
    %1215 = vmatpush1.xpose.msra.mxu0 0.0
    %1216 = vmatprep.subr.mxu0 0.0
    %1217 = vmatpush1.xpose.msra.mxu0 0.0
    %1218 = vmatprep.subr.mxu0 0.0
    %1219 = vmatpush1.xpose.msra.mxu0 0.0
    %1220 = vmatprep.subr.mxu0 0.0
    %1221 = vmatpush1.xpose.msra.mxu0 0.0
    %1222 = vmatprep.subr.mxu0 0.0
    %1223 = vmatpush1.xpose.msra.mxu0 0.0
    %1224 = vmatprep.subr.mxu0 0.0
    %1225 = vmatpush1.xpose.msra.mxu0 0.0
    %1226 = vmatprep.subr.mxu0 0.0
    %1227 = vmatpush1.xpose.msra.mxu0 0.0
    %1228 = vmatprep.subr.mxu0 0.0
    %1229 = vmatpush1.xpose.msra.mxu0 0.0
    %1230 = vmatprep.subr.mxu0 0.0
    %1231 = vmatpush1.xpose.msra.mxu0 0.0
    %1232 = vmatprep.subr.mxu0 0.0
    %1233 = vmatpush1.xpose.msra.mxu0 0.0
    %1234 = vmatprep.subr.mxu0 0.0
    %1235 = vmatpush1.xpose.msra.mxu0 0.0
    %1236 = vmatprep.subr.mxu0 0.0
    %1237 = vmatpush1.xpose.msra.mxu0 0.0
    %1238 = vmatprep.subr.mxu0 0.0
    %1239 = vmatpush1.xpose.msra.mxu0 0.0
    %1240 = vmatprep.subr.mxu0 0.0
    %1241 = vmatpush1.xpose.msra.mxu0 0.0
    %1242 = vmatprep.subr.mxu0 0.0
    %1243 = vmatpush1.xpose.msra.mxu0 0.0
    %1244 = vmatprep.subr.mxu0 0.0
    %1245 = vmatpush1.xpose.msra.mxu0 0.0
    %1246 = vmatprep.subr.mxu0 0.0
    %1247 = vmatpush1.xpose.msra.mxu0 0.0
    %1248 = vmatprep.subr.mxu0 0.0
    %1249 = vmatpush1.xpose.msra.mxu0 0.0
    %1250 = vmatprep.subr.mxu0 0.0
    %1251 = vmatpush1.xpose.msra.mxu0 0.0
    %1252 = vmatprep.subr.mxu0 0.0
    %1253 = vmatpush1.xpose.msra.mxu0 0.0
    %1254 = vmatprep.subr.mxu0 0.0
    %1255 = vmatpush1.xpose.msra.mxu0 0.0
    %1256 = vmatprep.subr.mxu0 0.0
    %1257 = vmatpush1.xpose.msra.mxu0 0.0
    %1258 = vmatprep.subr.mxu0 0.0
    %1259 = vmatpush1.xpose.msra.mxu0 0.0
    %1260 = vmatprep.subr.mxu0 0.0
    %1261 = vmatpush1.xpose.msra.mxu0 0.0
    %1262 = vmatprep.subr.mxu0 0.0
    %1263 = vmatpush1.xpose.msra.mxu0 0.0
    %1264 = vmatprep.subr.mxu0 0.0
    %1265 = vmatpush1.xpose.msra.mxu0 0.0
    %1266 = vmatprep.mubr.f32.mxu0 0.0
    %1267 = vmatmul.mubr.f32.gmra.mrb[0].mxu0 %v1197
    %v1268 = vpop.f32.mrb[0].mxu0
    %v1269 = vadd.f32 0.0, %v1268
    %v1270 = vpop.f32.mrb[0].mxu0
    %1271 = vdwg.mxu0
    %v1273 = vsel %vm1119, %v443, 0
    %v1276 = vsel %vm1119, %v753, 0
    %1278 = vmatprep.subr.mxu0 0.0
    %1279 = vmatpush1.xpose.msra.mxu0 %v1276
    %1280 = vmatprep.subr.mxu0 0.0
    %1281 = vmatpush1.xpose.msra.mxu0 0.0
    %1282 = vmatprep.subr.mxu0 0.0
    %1283 = vmatpush1.xpose.msra.mxu0 0.0
    %1284 = vmatprep.subr.mxu0 0.0
    %1285 = vmatpush1.xpose.msra.mxu0 0.0
    %1286 = vmatprep.subr.mxu0 0.0
    %1287 = vmatpush1.xpose.msra.mxu0 0.0
    %1288 = vmatprep.subr.mxu0 0.0
    %1289 = vmatpush1.xpose.msra.mxu0 0.0
    %1290 = vmatprep.subr.mxu0 0.0
    %1291 = vmatpush1.xpose.msra.mxu0 0.0
    %1292 = vmatprep.subr.mxu0 0.0
    %1293 = vmatpush1.xpose.msra.mxu0 0.0
    %1294 = vmatprep.subr.mxu0 0.0
    %1295 = vmatpush1.xpose.msra.mxu0 0.0
    %1296 = vmatprep.subr.mxu0 0.0
    %1297 = vmatpush1.xpose.msra.mxu0 0.0
    %1298 = vmatprep.subr.mxu0 0.0
    %1299 = vmatpush1.xpose.msra.mxu0 0.0
    %1300 = vmatprep.subr.mxu0 0.0
    %1301 = vmatpush1.xpose.msra.mxu0 0.0
    %1302 = vmatprep.subr.mxu0 0.0
    %1303 = vmatpush1.xpose.msra.mxu0 0.0
    %1304 = vmatprep.subr.mxu0 0.0
    %1305 = vmatpush1.xpose.msra.mxu0 0.0
    %1306 = vmatprep.subr.mxu0 0.0
    %1307 = vmatpush1.xpose.msra.mxu0 0.0
    %1308 = vmatprep.subr.mxu0 0.0
    %1309 = vmatpush1.xpose.msra.mxu0 0.0
    %1310 = vmatprep.subr.mxu0 0.0
    %1311 = vmatpush1.xpose.msra.mxu0 0.0
    %1312 = vmatprep.subr.mxu0 0.0
    %1313 = vmatpush1.xpose.msra.mxu0 0.0
    %1314 = vmatprep.subr.mxu0 0.0
    %1315 = vmatpush1.xpose.msra.mxu0 0.0
    %1316 = vmatprep.subr.mxu0 0.0
    %1317 = vmatpush1.xpose.msra.mxu0 0.0
    %1318 = vmatprep.subr.mxu0 0.0
    %1319 = vmatpush1.xpose.msra.mxu0 0.0
    %1320 = vmatprep.subr.mxu0 0.0
    %1321 = vmatpush1.xpose.msra.mxu0 0.0
    %1322 = vmatprep.subr.mxu0 0.0
    %1323 = vmatpush1.xpose.msra.mxu0 0.0
    %1324 = vmatprep.subr.mxu0 0.0
    %1325 = vmatpush1.xpose.msra.mxu0 0.0
    %1326 = vmatprep.subr.mxu0 0.0
    %1327 = vmatpush1.xpose.msra.mxu0 0.0
    %1328 = vmatprep.subr.mxu0 0.0
    %1329 = vmatpush1.xpose.msra.mxu0 0.0
    %1330 = vmatprep.subr.mxu0 0.0
    %1331 = vmatpush1.xpose.msra.mxu0 0.0
    %1332 = vmatprep.subr.mxu0 0.0
    %1333 = vmatpush1.xpose.msra.mxu0 0.0
    %1334 = vmatprep.subr.mxu0 0.0
    %1335 = vmatpush1.xpose.msra.mxu0 0.0
    %1336 = vmatprep.subr.mxu0 0.0
    %1337 = vmatpush1.xpose.msra.mxu0 0.0
    %1338 = vmatprep.subr.mxu0 0.0
    %1339 = vmatpush1.xpose.msra.mxu0 0.0
    %1340 = vmatprep.subr.mxu0 0.0
    %1341 = vmatpush1.xpose.msra.mxu0 0.0
    %1342 = vmatprep.mubr.f32.mxu0 0.0
    %1343 = vmatmul.mubr.f32.gmra.mrb[0].mxu0 %v1273
    %v1344 = vpop.f32.mrb[0].mxu0
    %v1345 = vadd.f32 0.0, %v1344
    %v1346 = vpop.f32.mrb[0].mxu0
    %1347 = vdwg.mxu0
    %v1349 = vsel %vm1119, %v444, 0
    %v1352 = vsel %vm1119, %v754, 0
    %1354 = vmatprep.subr.mxu0 0.0
    %1355 = vmatpush1.xpose.msra.mxu0 %v1352
    %1356 = vmatprep.subr.mxu0 0.0
    %1357 = vmatpush1.xpose.msra.mxu0 0.0
    %1358 = vmatprep.subr.mxu0 0.0
    %1359 = vmatpush1.xpose.msra.mxu0 0.0
    %1360 = vmatprep.subr.mxu0 0.0
    %1361 = vmatpush1.xpose.msra.mxu0 0.0
    %1362 = vmatprep.subr.mxu0 0.0
    %1363 = vmatpush1.xpose.msra.mxu0 0.0
    %1364 = vmatprep.subr.mxu0 0.0
    %1365 = vmatpush1.xpose.msra.mxu0 0.0
    %1366 = vmatprep.subr.mxu0 0.0
    %1367 = vmatpush1.xpose.msra.mxu0 0.0
    %1368 = vmatprep.subr.mxu0 0.0
    %1369 = vmatpush1.xpose.msra.mxu0 0.0
    %1370 = vmatprep.subr.mxu0 0.0
    %1371 = vmatpush1.xpose.msra.mxu0 0.0
    %1372 = vmatprep.subr.mxu0 0.0
    %1373 = vmatpush1.xpose.msra.mxu0 0.0
    %1374 = vmatprep.subr.mxu0 0.0
    %1375 = vmatpush1.xpose.msra.mxu0 0.0
    %1376 = vmatprep.subr.mxu0 0.0
    %1377 = vmatpush1.xpose.msra.mxu0 0.0
    %1378 = vmatprep.subr.mxu0 0.0
    %1379 = vmatpush1.xpose.msra.mxu0 0.0
    %1380 = vmatprep.subr.mxu0 0.0
    %1381 = vmatpush1.xpose.msra.mxu0 0.0
    %1382 = vmatprep.subr.mxu0 0.0
    %1383 = vmatpush1.xpose.msra.mxu0 0.0
    %1384 = vmatprep.subr.mxu0 0.0
    %1385 = vmatpush1.xpose.msra.mxu0 0.0
    %1386 = vmatprep.subr.mxu0 0.0
    %1387 = vmatpush1.xpose.msra.mxu0 0.0
    %1388 = vmatprep.subr.mxu0 0.0
    %1389 = vmatpush1.xpose.msra.mxu0 0.0
    %1390 = vmatprep.subr.mxu0 0.0
    %1391 = vmatpush1.xpose.msra.mxu0 0.0
    %1392 = vmatprep.subr.mxu0 0.0
    %1393 = vmatpush1.xpose.msra.mxu0 0.0
    %1394 = vmatprep.subr.mxu0 0.0
    %1395 = vmatpush1.xpose.msra.mxu0 0.0
    %1396 = vmatprep.subr.mxu0 0.0
    %1397 = vmatpush1.xpose.msra.mxu0 0.0
    %1398 = vmatprep.subr.mxu0 0.0
    %1399 = vmatpush1.xpose.msra.mxu0 0.0
    %1400 = vmatprep.subr.mxu0 0.0
    %1401 = vmatpush1.xpose.msra.mxu0 0.0
    %1402 = vmatprep.subr.mxu0 0.0
    %1403 = vmatpush1.xpose.msra.mxu0 0.0
    %1404 = vmatprep.subr.mxu0 0.0
    %1405 = vmatpush1.xpose.msra.mxu0 0.0
    %1406 = vmatprep.subr.mxu0 0.0
    %1407 = vmatpush1.xpose.msra.mxu0 0.0
    %1408 = vmatprep.subr.mxu0 0.0
    %1409 = vmatpush1.xpose.msra.mxu0 0.0
    %1410 = vmatprep.subr.mxu0 0.0
    %1411 = vmatpush1.xpose.msra.mxu0 0.0
    %1412 = vmatprep.subr.mxu0 0.0
    %1413 = vmatpush1.xpose.msra.mxu0 0.0
    %1414 = vmatprep.subr.mxu0 0.0
    %1415 = vmatpush1.xpose.msra.mxu0 0.0
    %1416 = vmatprep.subr.mxu0 0.0
    %1417 = vmatpush1.xpose.msra.mxu0 0.0
    %1418 = vmatprep.mubr.f32.mxu0 0.0
    %1419 = vmatmul.mubr.f32.gmra.mrb[0].mxu0 %v1349
    %v1420 = vpop.f32.mrb[0].mxu0
    %v1421 = vadd.f32 0.0, %v1420
    %v1422 = vpop.f32.mrb[0].mxu0
    %1423 = vdwg.mxu0
    %v1425 = vsel %vm1119, %v509, 0
    %v1428 = vsel %vm1119, %v819, 0
    %1430 = vmatprep.subr.mxu0 0.0
    %1431 = vmatpush1.xpose.msra.mxu0 %v1428
    %1432 = vmatprep.subr.mxu0 0.0
    %1433 = vmatpush1.xpose.msra.mxu0 0.0
    %1434 = vmatprep.subr.mxu0 0.0
    %1435 = vmatpush1.xpose.msra.mxu0 0.0
    %1436 = vmatprep.subr.mxu0 0.0
    %1437 = vmatpush1.xpose.msra.mxu0 0.0
    %1438 = vmatprep.subr.mxu0 0.0
    %1439 = vmatpush1.xpose.msra.mxu0 0.0
    %1440 = vmatprep.subr.mxu0 0.0
    %1441 = vmatpush1.xpose.msra.mxu0 0.0
    %1442 = vmatprep.subr.mxu0 0.0
    %1443 = vmatpush1.xpose.msra.mxu0 0.0
    %1444 = vmatprep.subr.mxu0 0.0
    %1445 = vmatpush1.xpose.msra.mxu0 0.0
    %1446 = vmatprep.subr.mxu0 0.0
    %1447 = vmatpush1.xpose.msra.mxu0 0.0
    %1448 = vmatprep.subr.mxu0 0.0
    %1449 = vmatpush1.xpose.msra.mxu0 0.0
    %1450 = vmatprep.subr.mxu0 0.0
    %1451 = vmatpush1.xpose.msra.mxu0 0.0
    %1452 = vmatprep.subr.mxu0 0.0
    %1453 = vmatpush1.xpose.msra.mxu0 0.0
    %1454 = vmatprep.subr.mxu0 0.0
    %1455 = vmatpush1.xpose.msra.mxu0 0.0
    %1456 = vmatprep.subr.mxu0 0.0
    %1457 = vmatpush1.xpose.msra.mxu0 0.0
    %1458 = vmatprep.subr.mxu0 0.0
    %1459 = vmatpush1.xpose.msra.mxu0 0.0
    %1460 = vmatprep.subr.mxu0 0.0
    %1461 = vmatpush1.xpose.msra.mxu0 0.0
    %1462 = vmatprep.subr.mxu0 0.0
    %1463 = vmatpush1.xpose.msra.mxu0 0.0
    %1464 = vmatprep.subr.mxu0 0.0
    %1465 = vmatpush1.xpose.msra.mxu0 0.0
    %1466 = vmatprep.subr.mxu0 0.0
    %1467 = vmatpush1.xpose.msra.mxu0 0.0
    %1468 = vmatprep.subr.mxu0 0.0
    %1469 = vmatpush1.xpose.msra.mxu0 0.0
    %1470 = vmatprep.subr.mxu0 0.0
    %1471 = vmatpush1.xpose.msra.mxu0 0.0
    %1472 = vmatprep.subr.mxu0 0.0
    %1473 = vmatpush1.xpose.msra.mxu0 0.0
    %1474 = vmatprep.subr.mxu0 0.0
    %1475 = vmatpush1.xpose.msra.mxu0 0.0
    %1476 = vmatprep.subr.mxu0 0.0
    %1477 = vmatpush1.xpose.msra.mxu0 0.0
    %1478 = vmatprep.subr.mxu0 0.0
    %1479 = vmatpush1.xpose.msra.mxu0 0.0
    %1480 = vmatprep.subr.mxu0 0.0
    %1481 = vmatpush1.xpose.msra.mxu0 0.0
    %1482 = vmatprep.subr.mxu0 0.0
    %1483 = vmatpush1.xpose.msra.mxu0 0.0
    %1484 = vmatprep.subr.mxu0 0.0
    %1485 = vmatpush1.xpose.msra.mxu0 0.0
    %1486 = vmatprep.subr.mxu0 0.0
    %1487 = vmatpush1.xpose.msra.mxu0 0.0
    %1488 = vmatprep.subr.mxu0 0.0
    %1489 = vmatpush1.xpose.msra.mxu0 0.0
    %1490 = vmatprep.subr.mxu0 0.0
    %1491 = vmatpush1.xpose.msra.mxu0 0.0
    %1492 = vmatprep.subr.mxu0 0.0
    %1493 = vmatpush1.xpose.msra.mxu0 0.0
    %1494 = vmatprep.mubr.f32.mxu0 0.0
    %1495 = vmatmul.mubr.f32.gmra.mrb[0].mxu0 %v1425
    %v1496 = vpop.f32.mrb[0].mxu0
    %v1497 = vadd.f32 0.0, %v1496
    %v1498 = vpop.f32.mrb[0].mxu0
    %1499 = vdwg.mxu0
    %v1501 = vsel %vm1119, %v510, 0
    %v1504 = vsel %vm1119, %v820, 0
    %1506 = vmatprep.subr.mxu0 0.0
    %1507 = vmatpush1.xpose.msra.mxu0 %v1504
    %1508 = vmatprep.subr.mxu0 0.0
    %1509 = vmatpush1.xpose.msra.mxu0 0.0
    %1510 = vmatprep.subr.mxu0 0.0
    %1511 = vmatpush1.xpose.msra.mxu0 0.0
    %1512 = vmatprep.subr.mxu0 0.0
    %1513 = vmatpush1.xpose.msra.mxu0 0.0
    %1514 = vmatprep.subr.mxu0 0.0
    %1515 = vmatpush1.xpose.msra.mxu0 0.0
    %1516 = vmatprep.subr.mxu0 0.0
    %1517 = vmatpush1.xpose.msra.mxu0 0.0
    %1518 = vmatprep.subr.mxu0 0.0
    %1519 = vmatpush1.xpose.msra.mxu0 0.0
    %1520 = vmatprep.subr.mxu0 0.0
    %1521 = vmatpush1.xpose.msra.mxu0 0.0
    %1522 = vmatprep.subr.mxu0 0.0
    %1523 = vmatpush1.xpose.msra.mxu0 0.0
    %1524 = vmatprep.subr.mxu0 0.0
    %1525 = vmatpush1.xpose.msra.mxu0 0.0
    %1526 = vmatprep.subr.mxu0 0.0
    %1527 = vmatpush1.xpose.msra.mxu0 0.0
    %1528 = vmatprep.subr.mxu0 0.0
    %1529 = vmatpush1.xpose.msra.mxu0 0.0
    %1530 = vmatprep.subr.mxu0 0.0
    %1531 = vmatpush1.xpose.msra.mxu0 0.0
    %1532 = vmatprep.subr.mxu0 0.0
    %1533 = vmatpush1.xpose.msra.mxu0 0.0
    %1534 = vmatprep.subr.mxu0 0.0
    %1535 = vmatpush1.xpose.msra.mxu0 0.0
    %1536 = vmatprep.subr.mxu0 0.0
    %1537 = vmatpush1.xpose.msra.mxu0 0.0
    %1538 = vmatprep.subr.mxu0 0.0
    %1539 = vmatpush1.xpose.msra.mxu0 0.0
    %1540 = vmatprep.subr.mxu0 0.0
    %1541 = vmatpush1.xpose.msra.mxu0 0.0
    %1542 = vmatprep.subr.mxu0 0.0
    %1543 = vmatpush1.xpose.msra.mxu0 0.0
    %1544 = vmatprep.subr.mxu0 0.0
    %1545 = vmatpush1.xpose.msra.mxu0 0.0
    %1546 = vmatprep.subr.mxu0 0.0
    %1547 = vmatpush1.xpose.msra.mxu0 0.0
    %1548 = vmatprep.subr.mxu0 0.0
    %1549 = vmatpush1.xpose.msra.mxu0 0.0
    %1550 = vmatprep.subr.mxu0 0.0
    %1551 = vmatpush1.xpose.msra.mxu0 0.0
    %1552 = vmatprep.subr.mxu0 0.0
    %1553 = vmatpush1.xpose.msra.mxu0 0.0
    %1554 = vmatprep.subr.mxu0 0.0
    %1555 = vmatpush1.xpose.msra.mxu0 0.0
    %1556 = vmatprep.subr.mxu0 0.0
    %1557 = vmatpush1.xpose.msra.mxu0 0.0
    %1558 = vmatprep.subr.mxu0 0.0
    %1559 = vmatpush1.xpose.msra.mxu0 0.0
    %1560 = vmatprep.subr.mxu0 0.0
    %1561 = vmatpush1.xpose.msra.mxu0 0.0
    %1562 = vmatprep.subr.mxu0 0.0
    %1563 = vmatpush1.xpose.msra.mxu0 0.0
    %1564 = vmatprep.subr.mxu0 0.0
    %1565 = vmatpush1.xpose.msra.mxu0 0.0
    %1566 = vmatprep.subr.mxu0 0.0
    %1567 = vmatpush1.xpose.msra.mxu0 0.0
    %1568 = vmatprep.subr.mxu0 0.0
    %1569 = vmatpush1.xpose.msra.mxu0 0.0
    %1570 = vmatprep.mubr.f32.mxu0 0.0
    %1571 = vmatmul.mubr.f32.gmra.mrb[0].mxu0 %v1501
    %v1572 = vpop.f32.mrb[0].mxu0
    %v1573 = vadd.f32 0.0, %v1572
    %v1574 = vpop.f32.mrb[0].mxu0
    %1575 = vdwg.mxu0
    %v1577 = vsel %vm1119, %v511, 0
    %v1580 = vsel %vm1119, %v821, 0
    %1582 = vmatprep.subr.mxu0 0.0
    %1583 = vmatpush1.xpose.msra.mxu0 %v1580
    %1584 = vmatprep.subr.mxu0 0.0
    %1585 = vmatpush1.xpose.msra.mxu0 0.0
    %1586 = vmatprep.subr.mxu0 0.0
    %1587 = vmatpush1.xpose.msra.mxu0 0.0
    %1588 = vmatprep.subr.mxu0 0.0
    %1589 = vmatpush1.xpose.msra.mxu0 0.0
    %1590 = vmatprep.subr.mxu0 0.0
    %1591 = vmatpush1.xpose.msra.mxu0 0.0
    %1592 = vmatprep.subr.mxu0 0.0
    %1593 = vmatpush1.xpose.msra.mxu0 0.0
    %1594 = vmatprep.subr.mxu0 0.0
    %1595 = vmatpush1.xpose.msra.mxu0 0.0
    %1596 = vmatprep.subr.mxu0 0.0
    %1597 = vmatpush1.xpose.msra.mxu0 0.0
    %1598 = vmatprep.subr.mxu0 0.0
    %1599 = vmatpush1.xpose.msra.mxu0 0.0
    %1600 = vmatprep.subr.mxu0 0.0
    %1601 = vmatpush1.xpose.msra.mxu0 0.0
    %1602 = vmatprep.subr.mxu0 0.0
    %1603 = vmatpush1.xpose.msra.mxu0 0.0
    %1604 = vmatprep.subr.mxu0 0.0
    %1605 = vmatpush1.xpose.msra.mxu0 0.0
    %1606 = vmatprep.subr.mxu0 0.0
    %1607 = vmatpush1.xpose.msra.mxu0 0.0
    %1608 = vmatprep.subr.mxu0 0.0
    %1609 = vmatpush1.xpose.msra.mxu0 0.0
    %1610 = vmatprep.subr.mxu0 0.0
    %1611 = vmatpush1.xpose.msra.mxu0 0.0
    %1612 = vmatprep.subr.mxu0 0.0
    %1613 = vmatpush1.xpose.msra.mxu0 0.0
    %1614 = vmatprep.subr.mxu0 0.0
    %1615 = vmatpush1.xpose.msra.mxu0 0.0
    %1616 = vmatprep.subr.mxu0 0.0
    %1617 = vmatpush1.xpose.msra.mxu0 0.0
    %1618 = vmatprep.subr.mxu0 0.0
    %1619 = vmatpush1.xpose.msra.mxu0 0.0
    %1620 = vmatprep.subr.mxu0 0.0
    %1621 = vmatpush1.xpose.msra.mxu0 0.0
    %1622 = vmatprep.subr.mxu0 0.0
    %1623 = vmatpush1.xpose.msra.mxu0 0.0
    %1624 = vmatprep.subr.mxu0 0.0
    %1625 = vmatpush1.xpose.msra.mxu0 0.0
    %1626 = vmatprep.subr.mxu0 0.0
    %1627 = vmatpush1.xpose.msra.mxu0 0.0
    %1628 = vmatprep.subr.mxu0 0.0
    %1629 = vmatpush1.xpose.msra.mxu0 0.0
    %1630 = vmatprep.subr.mxu0 0.0
    %1631 = vmatpush1.xpose.msra.mxu0 0.0
    %1632 = vmatprep.subr.mxu0 0.0
    %1633 = vmatpush1.xpose.msra.mxu0 0.0
    %1634 = vmatprep.subr.mxu0 0.0
    %1635 = vmatpush1.xpose.msra.mxu0 0.0
    %1636 = vmatprep.subr.mxu0 0.0
    %1637 = vmatpush1.xpose.msra.mxu0 0.0
    %1638 = vmatprep.subr.mxu0 0.0
    %1639 = vmatpush1.xpose.msra.mxu0 0.0
    %1640 = vmatprep.subr.mxu0 0.0
    %1641 = vmatpush1.xpose.msra.mxu0 0.0
    %1642 = vmatprep.subr.mxu0 0.0
    %1643 = vmatpush1.xpose.msra.mxu0 0.0
    %1644 = vmatprep.subr.mxu0 0.0
    %1645 = vmatpush1.xpose.msra.mxu0 0.0
    %1646 = vmatprep.mubr.f32.mxu0 0.0
    %1647 = vmatmul.mubr.f32.gmra.mrb[0].mxu0 %v1577
    %v1648 = vpop.f32.mrb[0].mxu0
    %v1649 = vadd.f32 0.0, %v1648
    %v1650 = vpop.f32.mrb[0].mxu0
    %1651 = vdwg.mxu0
    %v1653 = vsel %vm1119, %v512, 0
    %v1656 = vsel %vm1119, %v822, 0
    %1658 = vmatprep.subr.mxu0 0.0
    %1659 = vmatpush1.xpose.msra.mxu0 %v1656
    %1660 = vmatprep.subr.mxu0 0.0
    %1661 = vmatpush1.xpose.msra.mxu0 0.0
    %1662 = vmatprep.subr.mxu0 0.0
    %1663 = vmatpush1.xpose.msra.mxu0 0.0
    %1664 = vmatprep.subr.mxu0 0.0
    %1665 = vmatpush1.xpose.msra.mxu0 0.0
    %1666 = vmatprep.subr.mxu0 0.0
    %1667 = vmatpush1.xpose.msra.mxu0 0.0
    %1668 = vmatprep.subr.mxu0 0.0
    %1669 = vmatpush1.xpose.msra.mxu0 0.0
    %1670 = vmatprep.subr.mxu0 0.0
    %1671 = vmatpush1.xpose.msra.mxu0 0.0
    %1672 = vmatprep.subr.mxu0 0.0
    %1673 = vmatpush1.xpose.msra.mxu0 0.0
    %1674 = vmatprep.subr.mxu0 0.0
    %1675 = vmatpush1.xpose.msra.mxu0 0.0
    %1676 = vmatprep.subr.mxu0 0.0
    %1677 = vmatpush1.xpose.msra.mxu0 0.0
    %1678 = vmatprep.subr.mxu0 0.0
    %1679 = vmatpush1.xpose.msra.mxu0 0.0
    %1680 = vmatprep.subr.mxu0 0.0
    %1681 = vmatpush1.xpose.msra.mxu0 0.0
    %1682 = vmatprep.subr.mxu0 0.0
    %1683 = vmatpush1.xpose.msra.mxu0 0.0
    %1684 = vmatprep.subr.mxu0 0.0
    %1685 = vmatpush1.xpose.msra.mxu0 0.0
    %1686 = vmatprep.subr.mxu0 0.0
    %1687 = vmatpush1.xpose.msra.mxu0 0.0
    %1688 = vmatprep.subr.mxu0 0.0
    %1689 = vmatpush1.xpose.msra.mxu0 0.0
    %1690 = vmatprep.subr.mxu0 0.0
    %1691 = vmatpush1.xpose.msra.mxu0 0.0
    %1692 = vmatprep.subr.mxu0 0.0
    %1693 = vmatpush1.xpose.msra.mxu0 0.0
    %1694 = vmatprep.subr.mxu0 0.0
    %1695 = vmatpush1.xpose.msra.mxu0 0.0
    %1696 = vmatprep.subr.mxu0 0.0
    %1697 = vmatpush1.xpose.msra.mxu0 0.0
    %1698 = vmatprep.subr.mxu0 0.0
    %1699 = vmatpush1.xpose.msra.mxu0 0.0
    %1700 = vmatprep.subr.mxu0 0.0
    %1701 = vmatpush1.xpose.msra.mxu0 0.0
    %1702 = vmatprep.subr.mxu0 0.0
    %1703 = vmatpush1.xpose.msra.mxu0 0.0
    %1704 = vmatprep.subr.mxu0 0.0
    %1705 = vmatpush1.xpose.msra.mxu0 0.0
    %1706 = vmatprep.subr.mxu0 0.0
    %1707 = vmatpush1.xpose.msra.mxu0 0.0
    %1708 = vmatprep.subr.mxu0 0.0
    %1709 = vmatpush1.xpose.msra.mxu0 0.0
    %1710 = vmatprep.subr.mxu0 0.0
    %1711 = vmatpush1.xpose.msra.mxu0 0.0
    %1712 = vmatprep.subr.mxu0 0.0
    %1713 = vmatpush1.xpose.msra.mxu0 0.0
    %1714 = vmatprep.subr.mxu0 0.0
    %1715 = vmatpush1.xpose.msra.mxu0 0.0
    %1716 = vmatprep.subr.mxu0 0.0
    %1717 = vmatpush1.xpose.msra.mxu0 0.0
    %1718 = vmatprep.subr.mxu0 0.0
    %1719 = vmatpush1.xpose.msra.mxu0 0.0
    %1720 = vmatprep.subr.mxu0 0.0
    %1721 = vmatpush1.xpose.msra.mxu0 0.0
    %1722 = vmatprep.mubr.f32.mxu0 0.0
    %1723 = vmatmul.mubr.f32.gmra.mrb[0].mxu0 %v1653
    %v1724 = vpop.f32.mrb[0].mxu0
    %v1725 = vadd.f32 0.0, %v1724
    %v1726 = vpop.f32.mrb[0].mxu0
    %1727 = vdwg.mxu0
    %vm1728 = vcmp.eq.f32.partialorder %v64, 0.0
    %vm1729 = vcmp.eq.f32.partialorder %v65, 0.0
    %v1730 = vsel %vm1728, 1, 0
    %v1731 = vsel %vm1729, 1, 0
    %v1732 = vlaneseq
    %v1733 = vshrl.u32 %v1732, 7
    %v1734 = vsub.s32 0, %v1733
    %v1735 = vrot.slane %v1730, %v1734
    %v1736 = vlaneseq
    %v1737 = vshrl.u32 %v1736, 7
    %v1738 = vsub.s32 0, %v1737
    %v1739 = vrot.slane %v1731, %v1738
    %vm1740 = vcmp.eq.s32.totalorder %v1735, 1
    %vm1741 = vcmp.eq.s32.totalorder %v1739, 1
    %v1742 = vsel %vm1740, -1e+09, %v1193
    %v1743 = vsel %vm1740, -1e+09, %v1269
    %v1744 = vsel %vm1740, -1e+09, %v1345
    %v1745 = vsel %vm1740, -1e+09, %v1421
    %v1746 = vsel %vm1741, -1e+09, %v1497
    %v1747 = vsel %vm1741, -1e+09, %v1573
    %v1748 = vsel %vm1741, -1e+09, %v1649
    %v1749 = vsel %vm1741, -1e+09, %v1725
    %v1750 = vsel %vm1119, %v1742, -inf
    %1751 = vmax.xlane.f32.xlu0 %v1750
    %v1752 = vpop.xlane.xlu0 %1751
    %v1753 = vsel %vm1119, %v1743, -inf
    %1754 = vmax.xlane.f32.xlu0 %v1753
    %v1755 = vpop.xlane.xlu0 %1754
    %v1756 = vsel %vm1119, %v1744, -inf
    %1757 = vmax.xlane.f32.xlu0 %v1756
    %v1758 = vpop.xlane.xlu0 %1757
    %v1759 = vsel %vm1119, %v1745, -inf
    %1760 = vmax.xlane.f32.xlu0 %v1759
    %v1761 = vpop.xlane.xlu0 %1760
    %v1762 = vsel %vm1119, %v1746, -inf
    %1763 = vmax.xlane.f32.xlu0 %v1762
    %v1764 = vpop.xlane.xlu0 %1763
    %v1765 = vsel %vm1119, %v1747, -inf
    %1766 = vmax.xlane.f32.xlu0 %v1765
    %v1767 = vpop.xlane.xlu0 %1766
    %v1768 = vsel %vm1119, %v1748, -inf
    %1769 = vmax.xlane.f32.xlu0 %v1768
    %v1770 = vpop.xlane.xlu0 %1769
    %v1771 = vsel %vm1119, %v1749, -inf
    %1772 = vmax.xlane.f32.xlu0 %v1771
    %v1773 = vpop.xlane.xlu0 %1772
    %v1774 = vsub.f32 %v1742, %v1752
    %v1775 = vsub.f32 %v1743, %v1755
    %v1776 = vsub.f32 %v1744, %v1758
    %v1777 = vsub.f32 %v1745, %v1761
    %v1778 = vsub.f32 %v1746, %v1764
    %v1779 = vsub.f32 %v1747, %v1767
    %v1780 = vsub.f32 %v1748, %v1770
    %v1781 = vsub.f32 %v1749, %v1773
    %v1782 = vmul.f32 %v1774, 1.442695
    %v1783 = vpow.pop %v1782
    %v1784 = vmul.f32 %v1775, 1.442695
    %v1785 = vpow.pop %v1784
    %v1786 = vmul.f32 %v1776, 1.442695
    %v1787 = vpow.pop %v1786
    %v1788 = vmul.f32 %v1777, 1.442695
    %v1789 = vpow.pop %v1788
    %v1790 = vmul.f32 %v1778, 1.442695
    %v1791 = vpow.pop %v1790
    %v1792 = vmul.f32 %v1779, 1.442695
    %v1793 = vpow.pop %v1792
    %v1794 = vmul.f32 %v1780, 1.442695
    %v1795 = vpow.pop %v1794
    %v1796 = vmul.f32 %v1781, 1.442695
    %v1797 = vpow.pop %v1796
    %v1798 = vsel %vm1119, %v1783, 0.0
    %1799 = vadd.xlane.f32.xlu0 %v1798
    %v1800 = vpop.xlane.xlu0 %1799
    %v1801 = vsel %vm1119, %v1785, 0.0
    %1802 = vadd.xlane.f32.xlu0 %v1801
    %v1803 = vpop.xlane.xlu0 %1802
    %v1804 = vsel %vm1119, %v1787, 0.0
    %1805 = vadd.xlane.f32.xlu0 %v1804
    %v1806 = vpop.xlane.xlu0 %1805
    %v1807 = vsel %vm1119, %v1789, 0.0
    %1808 = vadd.xlane.f32.xlu0 %v1807
    %v1809 = vpop.xlane.xlu0 %1808
    %v1810 = vsel %vm1119, %v1791, 0.0
    %1811 = vadd.xlane.f32.xlu0 %v1810
    %v1812 = vpop.xlane.xlu0 %1811
    %v1813 = vsel %vm1119, %v1793, 0.0
    %1814 = vadd.xlane.f32.xlu0 %v1813
    %v1815 = vpop.xlane.xlu0 %1814
    %v1816 = vsel %vm1119, %v1795, 0.0
    %1817 = vadd.xlane.f32.xlu0 %v1816
    %v1818 = vpop.xlane.xlu0 %1817
    %v1819 = vsel %vm1119, %v1797, 0.0
    %1820 = vadd.xlane.f32.xlu0 %v1819
    %v1821 = vpop.xlane.xlu0 %1820
    %v1822 = vrcp.pop %v1800
    %v1823 = vrcp.pop %v1803
    %v1824 = vrcp.pop %v1806
    %v1825 = vrcp.pop %v1809
    %v1826 = vrcp.pop %v1812
    %v1827 = vrcp.pop %v1815
    %v1828 = vrcp.pop %v1818
    %v1829 = vrcp.pop %v1821
    %v1830 = vmul.f32 %v1783, %v1822
    %v1831 = vmul.f32 %v1785, %v1823
    %v1832 = vmul.f32 %v1787, %v1824
    %v1833 = vmul.f32 %v1789, %v1825
    %v1834 = vmul.f32 %v1791, %v1826
    %v1835 = vmul.f32 %v1793, %v1827
    %v1836 = vmul.f32 %v1795, %v1828
    %v1837 = vmul.f32 %v1797, %v1829
    %v1839 = vsel %vm1119, %v1830, 0
    %1841 = vmatprep.subr.mxu0 0.0
    %1842 = vmatpush1.msra.mxu0 %v1047
    %1843 = vmatprep.subr.mxu0 0.0
    %1844 = vmatpush1.msra.mxu0 0.0
    %1845 = vmatprep.subr.mxu0 0.0
    %1846 = vmatpush1.msra.mxu0 0.0
    %1847 = vmatprep.subr.mxu0 0.0
    %1848 = vmatpush1.msra.mxu0 0.0
    %1849 = vmatprep.subr.mxu0 0.0
    %1850 = vmatpush1.msra.mxu0 0.0
    %1851 = vmatprep.subr.mxu0 0.0
    %1852 = vmatpush1.msra.mxu0 0.0
    %1853 = vmatprep.subr.mxu0 0.0
    %1854 = vmatpush1.msra.mxu0 0.0
    %1855 = vmatprep.subr.mxu0 0.0
    %1856 = vmatpush1.msra.mxu0 0.0
    %1857 = vmatprep.subr.mxu0 0.0
    %1858 = vmatpush1.msra.mxu0 0.0
    %1859 = vmatprep.subr.mxu0 0.0
    %1860 = vmatpush1.msra.mxu0 0.0
    %1861 = vmatprep.subr.mxu0 0.0
    %1862 = vmatpush1.msra.mxu0 0.0
    %1863 = vmatprep.subr.mxu0 0.0
    %1864 = vmatpush1.msra.mxu0 0.0
    %1865 = vmatprep.subr.mxu0 0.0
    %1866 = vmatpush1.msra.mxu0 0.0
    %1867 = vmatprep.subr.mxu0 0.0
    %1868 = vmatpush1.msra.mxu0 0.0
    %1869 = vmatprep.subr.mxu0 0.0
    %1870 = vmatpush1.msra.mxu0 0.0
    %1871 = vmatprep.subr.mxu0 0.0
    %1872 = vmatpush1.msra.mxu0 0.0
    %1873 = vmatprep.subr.mxu0 0.0
    %1874 = vmatpush1.msra.mxu0 0.0
    %1875 = vmatprep.subr.mxu0 0.0
    %1876 = vmatpush1.msra.mxu0 0.0
    %1877 = vmatprep.subr.mxu0 0.0
    %1878 = vmatpush1.msra.mxu0 0.0
    %1879 = vmatprep.subr.mxu0 0.0
    %1880 = vmatpush1.msra.mxu0 0.0
    %1881 = vmatprep.subr.mxu0 0.0
    %1882 = vmatpush1.msra.mxu0 0.0
    %1883 = vmatprep.subr.mxu0 0.0
    %1884 = vmatpush1.msra.mxu0 0.0
    %1885 = vmatprep.subr.mxu0 0.0
    %1886 = vmatpush1.msra.mxu0 0.0
    %1887 = vmatprep.subr.mxu0 0.0
    %1888 = vmatpush1.msra.mxu0 0.0
    %1889 = vmatprep.subr.mxu0 0.0
    %1890 = vmatpush1.msra.mxu0 0.0
    %1891 = vmatprep.subr.mxu0 0.0
    %1892 = vmatpush1.msra.mxu0 0.0
    %1893 = vmatprep.subr.mxu0 0.0
    %1894 = vmatpush1.msra.mxu0 0.0
    %1895 = vmatprep.subr.mxu0 0.0
    %1896 = vmatpush1.msra.mxu0 0.0
    %1897 = vmatprep.subr.mxu0 0.0
    %1898 = vmatpush1.msra.mxu0 0.0
    %1899 = vmatprep.subr.mxu0 0.0
    %1900 = vmatpush1.msra.mxu0 0.0
    %1901 = vmatprep.subr.mxu0 0.0
    %1902 = vmatpush1.msra.mxu0 0.0
    %1903 = vmatprep.subr.mxu0 0.0
    %1904 = vmatpush1.msra.mxu0 0.0
    %1905 = vmatprep.mubr.f32.mxu0 0.0
    %1906 = vmatmul.mubr.f32.gmra.mrb[0].mxu0 %v1839
    %v1907 = vpop.f32.mrb[0].mxu0
    %v1908 = vadd.f32 0.0, %v1907
    %v1909 = vpop.f32.mrb[0].mxu0
    %1910 = vdwg.mxu0
    %v1912 = vsel %vm1119, %v1831, 0
    %1914 = vmatprep.subr.mxu0 0.0
    %1915 = vmatpush1.msra.mxu0 %v1048
    %1916 = vmatprep.subr.mxu0 0.0
    %1917 = vmatpush1.msra.mxu0 0.0
    %1918 = vmatprep.subr.mxu0 0.0
    %1919 = vmatpush1.msra.mxu0 0.0
    %1920 = vmatprep.subr.mxu0 0.0
    %1921 = vmatpush1.msra.mxu0 0.0
    %1922 = vmatprep.subr.mxu0 0.0
    %1923 = vmatpush1.msra.mxu0 0.0
    %1924 = vmatprep.subr.mxu0 0.0
    %1925 = vmatpush1.msra.mxu0 0.0
    %1926 = vmatprep.subr.mxu0 0.0
    %1927 = vmatpush1.msra.mxu0 0.0
    %1928 = vmatprep.subr.mxu0 0.0
    %1929 = vmatpush1.msra.mxu0 0.0
    %1930 = vmatprep.subr.mxu0 0.0
    %1931 = vmatpush1.msra.mxu0 0.0
    %1932 = vmatprep.subr.mxu0 0.0
    %1933 = vmatpush1.msra.mxu0 0.0
    %1934 = vmatprep.subr.mxu0 0.0
    %1935 = vmatpush1.msra.mxu0 0.0
    %1936 = vmatprep.subr.mxu0 0.0
    %1937 = vmatpush1.msra.mxu0 0.0
    %1938 = vmatprep.subr.mxu0 0.0
    %1939 = vmatpush1.msra.mxu0 0.0
    %1940 = vmatprep.subr.mxu0 0.0
    %1941 = vmatpush1.msra.mxu0 0.0
    %1942 = vmatprep.subr.mxu0 0.0
    %1943 = vmatpush1.msra.mxu0 0.0
    %1944 = vmatprep.subr.mxu0 0.0
    %1945 = vmatpush1.msra.mxu0 0.0
    %1946 = vmatprep.subr.mxu0 0.0
    %1947 = vmatpush1.msra.mxu0 0.0
    %1948 = vmatprep.subr.mxu0 0.0
    %1949 = vmatpush1.msra.mxu0 0.0
    %1950 = vmatprep.subr.mxu0 0.0
    %1951 = vmatpush1.msra.mxu0 0.0
    %1952 = vmatprep.subr.mxu0 0.0
    %1953 = vmatpush1.msra.mxu0 0.0
    %1954 = vmatprep.subr.mxu0 0.0
    %1955 = vmatpush1.msra.mxu0 0.0
    %1956 = vmatprep.subr.mxu0 0.0
    %1957 = vmatpush1.msra.mxu0 0.0
    %1958 = vmatprep.subr.mxu0 0.0
    %1959 = vmatpush1.msra.mxu0 0.0
    %1960 = vmatprep.subr.mxu0 0.0
    %1961 = vmatpush1.msra.mxu0 0.0
    %1962 = vmatprep.subr.mxu0 0.0
    %1963 = vmatpush1.msra.mxu0 0.0
    %1964 = vmatprep.subr.mxu0 0.0
    %1965 = vmatpush1.msra.mxu0 0.0
    %1966 = vmatprep.subr.mxu0 0.0
    %1967 = vmatpush1.msra.mxu0 0.0
    %1968 = vmatprep.subr.mxu0 0.0
    %1969 = vmatpush1.msra.mxu0 0.0
    %1970 = vmatprep.subr.mxu0 0.0
    %1971 = vmatpush1.msra.mxu0 0.0
    %1972 = vmatprep.subr.mxu0 0.0
    %1973 = vmatpush1.msra.mxu0 0.0
    %1974 = vmatprep.subr.mxu0 0.0
    %1975 = vmatpush1.msra.mxu0 0.0
    %1976 = vmatprep.subr.mxu0 0.0
    %1977 = vmatpush1.msra.mxu0 0.0
    %1978 = vmatprep.mubr.f32.mxu0 0.0
    %1979 = vmatmul.mubr.f32.gmra.mrb[0].mxu0 %v1912
    %v1980 = vpop.f32.mrb[0].mxu0
    %v1981 = vadd.f32 0.0, %v1980
    %v1982 = vpop.f32.mrb[0].mxu0
    %1983 = vdwg.mxu0
    %v1985 = vsel %vm1119, %v1832, 0
    %1987 = vmatprep.subr.mxu0 0.0
    %1988 = vmatpush1.msra.mxu0 %v1049
    %1989 = vmatprep.subr.mxu0 0.0
    %1990 = vmatpush1.msra.mxu0 0.0
    %1991 = vmatprep.subr.mxu0 0.0
    %1992 = vmatpush1.msra.mxu0 0.0
    %1993 = vmatprep.subr.mxu0 0.0
    %1994 = vmatpush1.msra.mxu0 0.0
    %1995 = vmatprep.subr.mxu0 0.0
    %1996 = vmatpush1.msra.mxu0 0.0
    %1997 = vmatprep.subr.mxu0 0.0
    %1998 = vmatpush1.msra.mxu0 0.0
    %1999 = vmatprep.subr.mxu0 0.0
    %2000 = vmatpush1.msra.mxu0 0.0
    %2001 = vmatprep.subr.mxu0 0.0
    %2002 = vmatpush1.msra.mxu0 0.0
    %2003 = vmatprep.subr.mxu0 0.0
    %2004 = vmatpush1.msra.mxu0 0.0
    %2005 = vmatprep.subr.mxu0 0.0
    %2006 = vmatpush1.msra.mxu0 0.0
    %2007 = vmatprep.subr.mxu0 0.0
    %2008 = vmatpush1.msra.mxu0 0.0
    %2009 = vmatprep.subr.mxu0 0.0
    %2010 = vmatpush1.msra.mxu0 0.0
    %2011 = vmatprep.subr.mxu0 0.0
    %2012 = vmatpush1.msra.mxu0 0.0
    %2013 = vmatprep.subr.mxu0 0.0
    %2014 = vmatpush1.msra.mxu0 0.0
    %2015 = vmatprep.subr.mxu0 0.0
    %2016 = vmatpush1.msra.mxu0 0.0
    %2017 = vmatprep.subr.mxu0 0.0
    %2018 = vmatpush1.msra.mxu0 0.0
    %2019 = vmatprep.subr.mxu0 0.0
    %2020 = vmatpush1.msra.mxu0 0.0
    %2021 = vmatprep.subr.mxu0 0.0
    %2022 = vmatpush1.msra.mxu0 0.0
    %2023 = vmatprep.subr.mxu0 0.0
    %2024 = vmatpush1.msra.mxu0 0.0
    %2025 = vmatprep.subr.mxu0 0.0
    %2026 = vmatpush1.msra.mxu0 0.0
    %2027 = vmatprep.subr.mxu0 0.0
    %2028 = vmatpush1.msra.mxu0 0.0
    %2029 = vmatprep.subr.mxu0 0.0
    %2030 = vmatpush1.msra.mxu0 0.0
    %2031 = vmatprep.subr.mxu0 0.0
    %2032 = vmatpush1.msra.mxu0 0.0
    %2033 = vmatprep.subr.mxu0 0.0
    %2034 = vmatpush1.msra.mxu0 0.0
    %2035 = vmatprep.subr.mxu0 0.0
    %2036 = vmatpush1.msra.mxu0 0.0
    %2037 = vmatprep.subr.mxu0 0.0
    %2038 = vmatpush1.msra.mxu0 0.0
    %2039 = vmatprep.subr.mxu0 0.0
    %2040 = vmatpush1.msra.mxu0 0.0
    %2041 = vmatprep.subr.mxu0 0.0
    %2042 = vmatpush1.msra.mxu0 0.0
    %2043 = vmatprep.subr.mxu0 0.0
    %2044 = vmatpush1.msra.mxu0 0.0
    %2045 = vmatprep.subr.mxu0 0.0
    %2046 = vmatpush1.msra.mxu0 0.0
    %2047 = vmatprep.subr.mxu0 0.0
    %2048 = vmatpush1.msra.mxu0 0.0
    %2049 = vmatprep.subr.mxu0 0.0
    %2050 = vmatpush1.msra.mxu0 0.0
    %2051 = vmatprep.mubr.f32.mxu0 0.0
    %2052 = vmatmul.mubr.f32.gmra.mrb[0].mxu0 %v1985
    %v2053 = vpop.f32.mrb[0].mxu0
    %v2054 = vadd.f32 0.0, %v2053
    %v2055 = vpop.f32.mrb[0].mxu0
    %2056 = vdwg.mxu0
    %v2058 = vsel %vm1119, %v1833, 0
    %2060 = vmatprep.subr.mxu0 0.0
    %2061 = vmatpush1.msra.mxu0 %v1050
    %2062 = vmatprep.subr.mxu0 0.0
    %2063 = vmatpush1.msra.mxu0 0.0
    %2064 = vmatprep.subr.mxu0 0.0
    %2065 = vmatpush1.msra.mxu0 0.0
    %2066 = vmatprep.subr.mxu0 0.0
    %2067 = vmatpush1.msra.mxu0 0.0
    %2068 = vmatprep.subr.mxu0 0.0
    %2069 = vmatpush1.msra.mxu0 0.0
    %2070 = vmatprep.subr.mxu0 0.0
    %2071 = vmatpush1.msra.mxu0 0.0
    %2072 = vmatprep.subr.mxu0 0.0
    %2073 = vmatpush1.msra.mxu0 0.0
    %2074 = vmatprep.subr.mxu0 0.0
    %2075 = vmatpush1.msra.mxu0 0.0
    %2076 = vmatprep.subr.mxu0 0.0
    %2077 = vmatpush1.msra.mxu0 0.0
    %2078 = vmatprep.subr.mxu0 0.0
    %2079 = vmatpush1.msra.mxu0 0.0
    %2080 = vmatprep.subr.mxu0 0.0
    %2081 = vmatpush1.msra.mxu0 0.0
    %2082 = vmatprep.subr.mxu0 0.0
    %2083 = vmatpush1.msra.mxu0 0.0
    %2084 = vmatprep.subr.mxu0 0.0
    %2085 = vmatpush1.msra.mxu0 0.0
    %2086 = vmatprep.subr.mxu0 0.0
    %2087 = vmatpush1.msra.mxu0 0.0
    %2088 = vmatprep.subr.mxu0 0.0
    %2089 = vmatpush1.msra.mxu0 0.0
    %2090 = vmatprep.subr.mxu0 0.0
    %2091 = vmatpush1.msra.mxu0 0.0
    %2092 = vmatprep.subr.mxu0 0.0
    %2093 = vmatpush1.msra.mxu0 0.0
    %2094 = vmatprep.subr.mxu0 0.0
    %2095 = vmatpush1.msra.mxu0 0.0
    %2096 = vmatprep.subr.mxu0 0.0
    %2097 = vmatpush1.msra.mxu0 0.0
    %2098 = vmatprep.subr.mxu0 0.0
    %2099 = vmatpush1.msra.mxu0 0.0
    %2100 = vmatprep.subr.mxu0 0.0
    %2101 = vmatpush1.msra.mxu0 0.0
    %2102 = vmatprep.subr.mxu0 0.0
    %2103 = vmatpush1.msra.mxu0 0.0
    %2104 = vmatprep.subr.mxu0 0.0
    %2105 = vmatpush1.msra.mxu0 0.0
    %2106 = vmatprep.subr.mxu0 0.0
    %2107 = vmatpush1.msra.mxu0 0.0
    %2108 = vmatprep.subr.mxu0 0.0
    %2109 = vmatpush1.msra.mxu0 0.0
    %2110 = vmatprep.subr.mxu0 0.0
    %2111 = vmatpush1.msra.mxu0 0.0
    %2112 = vmatprep.subr.mxu0 0.0
    %2113 = vmatpush1.msra.mxu0 0.0
    %2114 = vmatprep.subr.mxu0 0.0
    %2115 = vmatpush1.msra.mxu0 0.0
    %2116 = vmatprep.subr.mxu0 0.0
    %2117 = vmatpush1.msra.mxu0 0.0
    %2118 = vmatprep.subr.mxu0 0.0
    %2119 = vmatpush1.msra.mxu0 0.0
    %2120 = vmatprep.subr.mxu0 0.0
    %2121 = vmatpush1.msra.mxu0 0.0
    %2122 = vmatprep.subr.mxu0 0.0
    %2123 = vmatpush1.msra.mxu0 0.0
    %2124 = vmatprep.mubr.f32.mxu0 0.0
    %2125 = vmatmul.mubr.f32.gmra.mrb[0].mxu0 %v2058
    %v2126 = vpop.f32.mrb[0].mxu0
    %v2127 = vadd.f32 0.0, %v2126
    %v2128 = vpop.f32.mrb[0].mxu0
    %2129 = vdwg.mxu0
    %v2131 = vsel %vm1119, %v1834, 0
    %2133 = vmatprep.subr.mxu0 0.0
    %2134 = vmatpush1.msra.mxu0 %v1115
    %2135 = vmatprep.subr.mxu0 0.0
    %2136 = vmatpush1.msra.mxu0 0.0
    %2137 = vmatprep.subr.mxu0 0.0
    %2138 = vmatpush1.msra.mxu0 0.0
    %2139 = vmatprep.subr.mxu0 0.0
    %2140 = vmatpush1.msra.mxu0 0.0
    %2141 = vmatprep.subr.mxu0 0.0
    %2142 = vmatpush1.msra.mxu0 0.0
    %2143 = vmatprep.subr.mxu0 0.0
    %2144 = vmatpush1.msra.mxu0 0.0
    %2145 = vmatprep.subr.mxu0 0.0
    %2146 = vmatpush1.msra.mxu0 0.0
    %2147 = vmatprep.subr.mxu0 0.0
    %2148 = vmatpush1.msra.mxu0 0.0
    %2149 = vmatprep.subr.mxu0 0.0
    %2150 = vmatpush1.msra.mxu0 0.0
    %2151 = vmatprep.subr.mxu0 0.0
    %2152 = vmatpush1.msra.mxu0 0.0
    %2153 = vmatprep.subr.mxu0 0.0
    %2154 = vmatpush1.msra.mxu0 0.0
    %2155 = vmatprep.subr.mxu0 0.0
    %2156 = vmatpush1.msra.mxu0 0.0
    %2157 = vmatprep.subr.mxu0 0.0
    %2158 = vmatpush1.msra.mxu0 0.0
    %2159 = vmatprep.subr.mxu0 0.0
    %2160 = vmatpush1.msra.mxu0 0.0
    %2161 = vmatprep.subr.mxu0 0.0
    %2162 = vmatpush1.msra.mxu0 0.0
    %2163 = vmatprep.subr.mxu0 0.0
    %2164 = vmatpush1.msra.mxu0 0.0
    %2165 = vmatprep.subr.mxu0 0.0
    %2166 = vmatpush1.msra.mxu0 0.0
    %2167 = vmatprep.subr.mxu0 0.0
    %2168 = vmatpush1.msra.mxu0 0.0
    %2169 = vmatprep.subr.mxu0 0.0
    %2170 = vmatpush1.msra.mxu0 0.0
    %2171 = vmatprep.subr.mxu0 0.0
    %2172 = vmatpush1.msra.mxu0 0.0
    %2173 = vmatprep.subr.mxu0 0.0
    %2174 = vmatpush1.msra.mxu0 0.0
    %2175 = vmatprep.subr.mxu0 0.0
    %2176 = vmatpush1.msra.mxu0 0.0
    %2177 = vmatprep.subr.mxu0 0.0
    %2178 = vmatpush1.msra.mxu0 0.0
    %2179 = vmatprep.subr.mxu0 0.0
    %2180 = vmatpush1.msra.mxu0 0.0
    %2181 = vmatprep.subr.mxu0 0.0
    %2182 = vmatpush1.msra.mxu0 0.0
    %2183 = vmatprep.subr.mxu0 0.0
    %2184 = vmatpush1.msra.mxu0 0.0
    %2185 = vmatprep.subr.mxu0 0.0
    %2186 = vmatpush1.msra.mxu0 0.0
    %2187 = vmatprep.subr.mxu0 0.0
    %2188 = vmatpush1.msra.mxu0 0.0
    %2189 = vmatprep.subr.mxu0 0.0
    %2190 = vmatpush1.msra.mxu0 0.0
    %2191 = vmatprep.subr.mxu0 0.0
    %2192 = vmatpush1.msra.mxu0 0.0
    %2193 = vmatprep.subr.mxu0 0.0
    %2194 = vmatpush1.msra.mxu0 0.0
    %2195 = vmatprep.subr.mxu0 0.0
    %2196 = vmatpush1.msra.mxu0 0.0
    %2197 = vmatprep.mubr.f32.mxu0 0.0
    %2198 = vmatmul.mubr.f32.gmra.mrb[0].mxu0 %v2131
    %v2199 = vpop.f32.mrb[0].mxu0
    %v2200 = vadd.f32 0.0, %v2199
    %v2201 = vpop.f32.mrb[0].mxu0
    %2202 = vdwg.mxu0
    %v2204 = vsel %vm1119, %v1835, 0
    %2206 = vmatprep.subr.mxu0 0.0
    %2207 = vmatpush1.msra.mxu0 %v1116
    %2208 = vmatprep.subr.mxu0 0.0
    %2209 = vmatpush1.msra.mxu0 0.0
    %2210 = vmatprep.subr.mxu0 0.0
    %2211 = vmatpush1.msra.mxu0 0.0
    %2212 = vmatprep.subr.mxu0 0.0
    %2213 = vmatpush1.msra.mxu0 0.0
    %2214 = vmatprep.subr.mxu0 0.0
    %2215 = vmatpush1.msra.mxu0 0.0
    %2216 = vmatprep.subr.mxu0 0.0
    %2217 = vmatpush1.msra.mxu0 0.0
    %2218 = vmatprep.subr.mxu0 0.0
    %2219 = vmatpush1.msra.mxu0 0.0
    %2220 = vmatprep.subr.mxu0 0.0
    %2221 = vmatpush1.msra.mxu0 0.0
    %2222 = vmatprep.subr.mxu0 0.0
    %2223 = vmatpush1.msra.mxu0 0.0
    %2224 = vmatprep.subr.mxu0 0.0
    %2225 = vmatpush1.msra.mxu0 0.0
    %2226 = vmatprep.subr.mxu0 0.0
    %2227 = vmatpush1.msra.mxu0 0.0
    %2228 = vmatprep.subr.mxu0 0.0
    %2229 = vmatpush1.msra.mxu0 0.0
    %2230 = vmatprep.subr.mxu0 0.0
    %2231 = vmatpush1.msra.mxu0 0.0
    %2232 = vmatprep.subr.mxu0 0.0
    %2233 = vmatpush1.msra.mxu0 0.0
    %2234 = vmatprep.subr.mxu0 0.0
    %2235 = vmatpush1.msra.mxu0 0.0
    %2236 = vmatprep.subr.mxu0 0.0
    %2237 = vmatpush1.msra.mxu0 0.0
    %2238 = vmatprep.subr.mxu0 0.0
    %2239 = vmatpush1.msra.mxu0 0.0
    %2240 = vmatprep.subr.mxu0 0.0
    %2241 = vmatpush1.msra.mxu0 0.0
    %2242 = vmatprep.subr.mxu0 0.0
    %2243 = vmatpush1.msra.mxu0 0.0
    %2244 = vmatprep.subr.mxu0 0.0
    %2245 = vmatpush1.msra.mxu0 0.0
    %2246 = vmatprep.subr.mxu0 0.0
    %2247 = vmatpush1.msra.mxu0 0.0
    %2248 = vmatprep.subr.mxu0 0.0
    %2249 = vmatpush1.msra.mxu0 0.0
    %2250 = vmatprep.subr.mxu0 0.0
    %2251 = vmatpush1.msra.mxu0 0.0
    %2252 = vmatprep.subr.mxu0 0.0
    %2253 = vmatpush1.msra.mxu0 0.0
    %2254 = vmatprep.subr.mxu0 0.0
    %2255 = vmatpush1.msra.mxu0 0.0
    %2256 = vmatprep.subr.mxu0 0.0
    %2257 = vmatpush1.msra.mxu0 0.0
    %2258 = vmatprep.subr.mxu0 0.0
    %2259 = vmatpush1.msra.mxu0 0.0
    %2260 = vmatprep.subr.mxu0 0.0
    %2261 = vmatpush1.msra.mxu0 0.0
    %2262 = vmatprep.subr.mxu0 0.0
    %2263 = vmatpush1.msra.mxu0 0.0
    %2264 = vmatprep.subr.mxu0 0.0
    %2265 = vmatpush1.msra.mxu0 0.0
    %2266 = vmatprep.subr.mxu0 0.0
    %2267 = vmatpush1.msra.mxu0 0.0
    %2268 = vmatprep.subr.mxu0 0.0
    %2269 = vmatpush1.msra.mxu0 0.0
    %2270 = vmatprep.mubr.f32.mxu0 0.0
    %2271 = vmatmul.mubr.f32.gmra.mrb[0].mxu0 %v2204
    %v2272 = vpop.f32.mrb[0].mxu0
    %v2273 = vadd.f32 0.0, %v2272
    %v2274 = vpop.f32.mrb[0].mxu0
    %2275 = vdwg.mxu0
    %v2277 = vsel %vm1119, %v1836, 0
    %2279 = vmatprep.subr.mxu0 0.0
    %2280 = vmatpush1.msra.mxu0 %v1117
    %2281 = vmatprep.subr.mxu0 0.0
    %2282 = vmatpush1.msra.mxu0 0.0
    %2283 = vmatprep.subr.mxu0 0.0
    %2284 = vmatpush1.msra.mxu0 0.0
    %2285 = vmatprep.subr.mxu0 0.0
    %2286 = vmatpush1.msra.mxu0 0.0
    %2287 = vmatprep.subr.mxu0 0.0
    %2288 = vmatpush1.msra.mxu0 0.0
    %2289 = vmatprep.subr.mxu0 0.0
    %2290 = vmatpush1.msra.mxu0 0.0
    %2291 = vmatprep.subr.mxu0 0.0
    %2292 = vmatpush1.msra.mxu0 0.0
    %2293 = vmatprep.subr.mxu0 0.0
    %2294 = vmatpush1.msra.mxu0 0.0
    %2295 = vmatprep.subr.mxu0 0.0
    %2296 = vmatpush1.msra.mxu0 0.0
    %2297 = vmatprep.subr.mxu0 0.0
    %2298 = vmatpush1.msra.mxu0 0.0
    %2299 = vmatprep.subr.mxu0 0.0
    %2300 = vmatpush1.msra.mxu0 0.0
    %2301 = vmatprep.subr.mxu0 0.0
    %2302 = vmatpush1.msra.mxu0 0.0
    %2303 = vmatprep.subr.mxu0 0.0
    %2304 = vmatpush1.msra.mxu0 0.0
    %2305 = vmatprep.subr.mxu0 0.0
    %2306 = vmatpush1.msra.mxu0 0.0
    %2307 = vmatprep.subr.mxu0 0.0
    %2308 = vmatpush1.msra.mxu0 0.0
    %2309 = vmatprep.subr.mxu0 0.0
    %2310 = vmatpush1.msra.mxu0 0.0
    %2311 = vmatprep.subr.mxu0 0.0
    %2312 = vmatpush1.msra.mxu0 0.0
    %2313 = vmatprep.subr.mxu0 0.0
    %2314 = vmatpush1.msra.mxu0 0.0
    %2315 = vmatprep.subr.mxu0 0.0
    %2316 = vmatpush1.msra.mxu0 0.0
    %2317 = vmatprep.subr.mxu0 0.0
    %2318 = vmatpush1.msra.mxu0 0.0
    %2319 = vmatprep.subr.mxu0 0.0
    %2320 = vmatpush1.msra.mxu0 0.0
    %2321 = vmatprep.subr.mxu0 0.0
    %2322 = vmatpush1.msra.mxu0 0.0
    %2323 = vmatprep.subr.mxu0 0.0
    %2324 = vmatpush1.msra.mxu0 0.0
    %2325 = vmatprep.subr.mxu0 0.0
    %2326 = vmatpush1.msra.mxu0 0.0
    %2327 = vmatprep.subr.mxu0 0.0
    %2328 = vmatpush1.msra.mxu0 0.0
    %2329 = vmatprep.subr.mxu0 0.0
    %2330 = vmatpush1.msra.mxu0 0.0
    %2331 = vmatprep.subr.mxu0 0.0
    %2332 = vmatpush1.msra.mxu0 0.0
    %2333 = vmatprep.subr.mxu0 0.0
    %2334 = vmatpush1.msra.mxu0 0.0
    %2335 = vmatprep.subr.mxu0 0.0
    %2336 = vmatpush1.msra.mxu0 0.0
    %2337 = vmatprep.subr.mxu0 0.0
    %2338 = vmatpush1.msra.mxu0 0.0
    %2339 = vmatprep.subr.mxu0 0.0
    %2340 = vmatpush1.msra.mxu0 0.0
    %2341 = vmatprep.subr.mxu0 0.0
    %2342 = vmatpush1.msra.mxu0 0.0
    %2343 = vmatprep.mubr.f32.mxu0 0.0
    %2344 = vmatmul.mubr.f32.gmra.mrb[0].mxu0 %v2277
    %v2345 = vpop.f32.mrb[0].mxu0
    %v2346 = vadd.f32 0.0, %v2345
    %v2347 = vpop.f32.mrb[0].mxu0
    %2348 = vdwg.mxu0
    %v2350 = vsel %vm1119, %v1837, 0
    %2352 = vmatprep.subr.mxu0 0.0
    %2353 = vmatpush1.msra.mxu0 %v1118
    %2354 = vmatprep.subr.mxu0 0.0
    %2355 = vmatpush1.msra.mxu0 0.0
    %2356 = vmatprep.subr.mxu0 0.0
    %2357 = vmatpush1.msra.mxu0 0.0
    %2358 = vmatprep.subr.mxu0 0.0
    %2359 = vmatpush1.msra.mxu0 0.0
    %2360 = vmatprep.subr.mxu0 0.0
    %2361 = vmatpush1.msra.mxu0 0.0
    %2362 = vmatprep.subr.mxu0 0.0
    %2363 = vmatpush1.msra.mxu0 0.0
    %2364 = vmatprep.subr.mxu0 0.0
    %2365 = vmatpush1.msra.mxu0 0.0
    %2366 = vmatprep.subr.mxu0 0.0
    %2367 = vmatpush1.msra.mxu0 0.0
    %2368 = vmatprep.subr.mxu0 0.0
    %2369 = vmatpush1.msra.mxu0 0.0
    %2370 = vmatprep.subr.mxu0 0.0
    %2371 = vmatpush1.msra.mxu0 0.0
    %2372 = vmatprep.subr.mxu0 0.0
    %2373 = vmatpush1.msra.mxu0 0.0
    %2374 = vmatprep.subr.mxu0 0.0
    %2375 = vmatpush1.msra.mxu0 0.0
    %2376 = vmatprep.subr.mxu0 0.0
    %2377 = vmatpush1.msra.mxu0 0.0
    %2378 = vmatprep.subr.mxu0 0.0
    %2379 = vmatpush1.msra.mxu0 0.0
    %2380 = vmatprep.subr.mxu0 0.0
    %2381 = vmatpush1.msra.mxu0 0.0
    %2382 = vmatprep.subr.mxu0 0.0
    %2383 = vmatpush1.msra.mxu0 0.0
    %2384 = vmatprep.subr.mxu0 0.0
    %2385 = vmatpush1.msra.mxu0 0.0
    %2386 = vmatprep.subr.mxu0 0.0
    %2387 = vmatpush1.msra.mxu0 0.0
    %2388 = vmatprep.subr.mxu0 0.0
    %2389 = vmatpush1.msra.mxu0 0.0
    %2390 = vmatprep.subr.mxu0 0.0
    %2391 = vmatpush1.msra.mxu0 0.0
    %2392 = vmatprep.subr.mxu0 0.0
    %2393 = vmatpush1.msra.mxu0 0.0
    %2394 = vmatprep.subr.mxu0 0.0
    %2395 = vmatpush1.msra.mxu0 0.0
    %2396 = vmatprep.subr.mxu0 0.0
    %2397 = vmatpush1.msra.mxu0 0.0
    %2398 = vmatprep.subr.mxu0 0.0
    %2399 = vmatpush1.msra.mxu0 0.0
    %2400 = vmatprep.subr.mxu0 0.0
    %2401 = vmatpush1.msra.mxu0 0.0
    %2402 = vmatprep.subr.mxu0 0.0
    %2403 = vmatpush1.msra.mxu0 0.0
    %2404 = vmatprep.subr.mxu0 0.0
    %2405 = vmatpush1.msra.mxu0 0.0
    %2406 = vmatprep.subr.mxu0 0.0
    %2407 = vmatpush1.msra.mxu0 0.0
    %2408 = vmatprep.subr.mxu0 0.0
    %2409 = vmatpush1.msra.mxu0 0.0
    %2410 = vmatprep.subr.mxu0 0.0
    %2411 = vmatpush1.msra.mxu0 0.0
    %2412 = vmatprep.subr.mxu0 0.0
    %2413 = vmatpush1.msra.mxu0 0.0
    %2414 = vmatprep.subr.mxu0 0.0
    %2415 = vmatpush1.msra.mxu0 0.0
    %2416 = vmatprep.mubr.f32.mxu0 0.0
    %2417 = vmatmul.mubr.f32.gmra.mrb[0].mxu0 %v2350
    %v2418 = vpop.f32.mrb[0].mxu0
    %v2419 = vadd.f32 0.0, %v2418
    %v2420 = vpop.f32.mrb[0].mxu0
    %2421 = vdwg.mxu0
    %v2422 = vcombine.low %v1908, %v2054
    %v2423 = vcombine.high %v1908, %v2054
    %v2425 = vunpack.c.l.s4 1983009808
    %v2426 = vunpack.c.0.s8 %v2425
    %v2427 = vlaneseq
    %v2428 = vshrl.u32 %v2427, 7
    %v2429 = vsub.s32 %v2426, %v2428
    %v2430 = vrot.slane %v2422, %v2429
    %v2432 = vunpack.c.l.s4 1983009808
    %v2433 = vunpack.c.0.s8 %v2432
    %v2434 = vlaneseq
    %v2435 = vshrl.u32 %v2434, 7
    %v2436 = vsub.s32 %v2433, %v2435
    %v2437 = vrot.slane %v2423, %v2436
    %v2438 = vcombine.low %v1981, %v2127
    %v2439 = vcombine.high %v1981, %v2127
    %v2441 = vunpack.c.l.s4 1983009808
    %v2442 = vunpack.c.0.s8 %v2441
    %v2443 = vlaneseq
    %v2444 = vshrl.u32 %v2443, 7
    %v2445 = vsub.s32 %v2442, %v2444
    %v2446 = vrot.slane %v2438, %v2445
    %v2448 = vunpack.c.l.s4 1983009808
    %v2449 = vunpack.c.0.s8 %v2448
    %v2450 = vlaneseq
    %v2451 = vshrl.u32 %v2450, 7
    %v2452 = vsub.s32 %v2449, %v2451
    %v2453 = vrot.slane %v2439, %v2452
    %v2454 = vcombine.low %v2430, %v2446
    %v2455 = vcombine.high %v2430, %v2446
    %v2457 = vunpack.c.l.s4 1934713408
    %v2458 = vunpack.c.0.s8 %v2457
    %v2459 = vlaneseq
    %v2460 = vshrl.u32 %v2459, 7
    %v2461 = vsub.s32 %v2458, %v2460
    %v2462 = vrot.slane %v2454, %v2461
    %v2464 = vunpack.c.l.s4 1934713408
    %v2465 = vunpack.c.0.s8 %v2464
    %v2466 = vlaneseq
    %v2467 = vshrl.u32 %v2466, 7
    %v2468 = vsub.s32 %v2465, %v2467
    %v2469 = vrot.slane %v2455, %v2468
    %v2470 = vcombine.low %v2437, %v2453
    %v2471 = vcombine.high %v2437, %v2453
    %v2473 = vunpack.c.l.s4 1934713408
    %v2474 = vunpack.c.0.s8 %v2473
    %v2475 = vlaneseq
    %v2476 = vshrl.u32 %v2475, 7
    %v2477 = vsub.s32 %v2474, %v2476
    %v2478 = vrot.slane %v2470, %v2477
    %v2480 = vunpack.c.l.s4 1934713408
    %v2481 = vunpack.c.0.s8 %v2480
    %v2482 = vlaneseq
    %v2483 = vshrl.u32 %v2482, 7
    %v2484 = vsub.s32 %v2481, %v2483
    %v2485 = vrot.slane %v2471, %v2484
    %v2486 = vcombine.high %v2462, 0.0
    %v2487 = vcombine.high %v2469, 0.0
    %v2488 = vcombine.high %v2478, 0.0
    %v2489 = vcombine.high %v2485, 0.0
    %v2490 = vcombine.low %v2200, %v2346
    %v2491 = vcombine.high %v2200, %v2346
    %v2493 = vunpack.c.l.s4 1983009808
    %v2494 = vunpack.c.0.s8 %v2493
    %v2495 = vlaneseq
    %v2496 = vshrl.u32 %v2495, 7
    %v2497 = vsub.s32 %v2494, %v2496
    %v2498 = vrot.slane %v2490, %v2497
    %v2500 = vunpack.c.l.s4 1983009808
    %v2501 = vunpack.c.0.s8 %v2500
    %v2502 = vlaneseq
    %v2503 = vshrl.u32 %v2502, 7
    %v2504 = vsub.s32 %v2501, %v2503
    %v2505 = vrot.slane %v2491, %v2504
    %v2506 = vcombine.low %v2273, %v2419
    %v2507 = vcombine.high %v2273, %v2419
    %v2509 = vunpack.c.l.s4 1983009808
    %v2510 = vunpack.c.0.s8 %v2509
    %v2511 = vlaneseq
    %v2512 = vshrl.u32 %v2511, 7
    %v2513 = vsub.s32 %v2510, %v2512
    %v2514 = vrot.slane %v2506, %v2513
    %v2516 = vunpack.c.l.s4 1983009808
    %v2517 = vunpack.c.0.s8 %v2516
    %v2518 = vlaneseq
    %v2519 = vshrl.u32 %v2518, 7
    %v2520 = vsub.s32 %v2517, %v2519
    %v2521 = vrot.slane %v2507, %v2520
    %v2522 = vcombine.low %v2498, %v2514
    %v2523 = vcombine.high %v2498, %v2514
    %v2525 = vunpack.c.l.s4 1934713408
    %v2526 = vunpack.c.0.s8 %v2525
    %v2527 = vlaneseq
    %v2528 = vshrl.u32 %v2527, 7
    %v2529 = vsub.s32 %v2526, %v2528
    %v2530 = vrot.slane %v2522, %v2529
    %v2532 = vunpack.c.l.s4 1934713408
    %v2533 = vunpack.c.0.s8 %v2532
    %v2534 = vlaneseq
    %v2535 = vshrl.u32 %v2534, 7
    %v2536 = vsub.s32 %v2533, %v2535
    %v2537 = vrot.slane %v2523, %v2536
    %v2538 = vcombine.low %v2505, %v2521
    %v2539 = vcombine.high %v2505, %v2521
    %v2541 = vunpack.c.l.s4 1934713408
    %v2542 = vunpack.c.0.s8 %v2541
    %v2543 = vlaneseq
    %v2544 = vshrl.u32 %v2543, 7
    %v2545 = vsub.s32 %v2542, %v2544
    %v2546 = vrot.slane %v2538, %v2545
    %v2548 = vunpack.c.l.s4 1934713408
    %v2549 = vunpack.c.0.s8 %v2548
    %v2550 = vlaneseq
    %v2551 = vshrl.u32 %v2550, 7
    %v2552 = vsub.s32 %v2549, %v2551
    %v2553 = vrot.slane %v2539, %v2552
    %v2554 = vcombine.high %v2530, 0.0
    %v2555 = vcombine.high %v2537, 0.0
    %v2556 = vcombine.high %v2546, 0.0
    %v2557 = vcombine.high %v2553, 0.0
    %v2558 = vcombine.low %v2462, %v2469
    %v2560 = vunpack.c.l.s4 1983009808
    %v2561 = vunpack.c.0.s8 %v2560
    %v2562 = vlaneseq
    %v2563 = vshrl.u32 %v2562, 7
    %v2564 = vsub.s32 %v2561, %v2563
    %v2565 = vrot.slane %v2558, %v2564
    %v2566 = vcombine.low %v2486, %v2487
    %v2568 = vunpack.c.l.s4 1983009808
    %v2569 = vunpack.c.0.s8 %v2568
    %v2570 = vlaneseq
    %v2571 = vshrl.u32 %v2570, 7
    %v2572 = vsub.s32 %v2569, %v2571
    %v2573 = vrot.slane %v2566, %v2572
    %v2574 = vcombine.low %v2478, %v2485
    %v2576 = vunpack.c.l.s4 1983009808
    %v2577 = vunpack.c.0.s8 %v2576
    %v2578 = vlaneseq
    %v2579 = vshrl.u32 %v2578, 7
    %v2580 = vsub.s32 %v2577, %v2579
    %v2581 = vrot.slane %v2574, %v2580
    %v2582 = vcombine.low %v2488, %v2489
    %v2584 = vunpack.c.l.s4 1983009808
    %v2585 = vunpack.c.0.s8 %v2584
    %v2586 = vlaneseq
    %v2587 = vshrl.u32 %v2586, 7
    %v2588 = vsub.s32 %v2585, %v2587
    %v2589 = vrot.slane %v2582, %v2588
    %v2590 = vcombine.low %v2565, %v2573
    %v2591 = vcombine.high %v2565, %v2573
    %v2593 = vunpack.c.l.s4 1934713408
    %v2594 = vunpack.c.0.s8 %v2593
    %v2595 = vlaneseq
    %v2596 = vshrl.u32 %v2595, 7
    %v2597 = vsub.s32 %v2594, %v2596
    %v2598 = vrot.slane %v2590, %v2597
    %v2600 = vunpack.c.l.s4 1934713408
    %v2601 = vunpack.c.0.s8 %v2600
    %v2602 = vlaneseq
    %v2603 = vshrl.u32 %v2602, 7
    %v2604 = vsub.s32 %v2601, %v2603
    %v2605 = vrot.slane %v2591, %v2604
    %v2606 = vcombine.low %v2581, %v2589
    %v2607 = vcombine.high %v2581, %v2589
    %v2609 = vunpack.c.l.s4 1934713408
    %v2610 = vunpack.c.0.s8 %v2609
    %v2611 = vlaneseq
    %v2612 = vshrl.u32 %v2611, 7
    %v2613 = vsub.s32 %v2610, %v2612
    %v2614 = vrot.slane %v2606, %v2613
    %v2616 = vunpack.c.l.s4 1934713408
    %v2617 = vunpack.c.0.s8 %v2616
    %v2618 = vlaneseq
    %v2619 = vshrl.u32 %v2618, 7
    %v2620 = vsub.s32 %v2617, %v2619
    %v2621 = vrot.slane %v2607, %v2620
    %v2622 = vcombine.low %v2598, %v2614
    %v2623 = vcombine.high %v2598, %v2614
    %v2624 = vcombine.low %v2605, %v2621
    %v2625 = vcombine.high %v2605, %v2621
    %v2626 = vcombine.low %v2530, %v2537
    %v2628 = vunpack.c.l.s4 1983009808
    %v2629 = vunpack.c.0.s8 %v2628
    %v2630 = vlaneseq
    %v2631 = vshrl.u32 %v2630, 7
    %v2632 = vsub.s32 %v2629, %v2631
    %v2633 = vrot.slane %v2626, %v2632
    %v2634 = vcombine.low %v2554, %v2555
    %v2636 = vunpack.c.l.s4 1983009808
    %v2637 = vunpack.c.0.s8 %v2636
    %v2638 = vlaneseq
    %v2639 = vshrl.u32 %v2638, 7
    %v2640 = vsub.s32 %v2637, %v2639
    %v2641 = vrot.slane %v2634, %v2640
    %v2642 = vcombine.low %v2546, %v2553
    %v2644 = vunpack.c.l.s4 1983009808
    %v2645 = vunpack.c.0.s8 %v2644
    %v2646 = vlaneseq
    %v2647 = vshrl.u32 %v2646, 7
    %v2648 = vsub.s32 %v2645, %v2647
    %v2649 = vrot.slane %v2642, %v2648
    %v2650 = vcombine.low %v2556, %v2557
    %v2652 = vunpack.c.l.s4 1983009808
    %v2653 = vunpack.c.0.s8 %v2652
    %v2654 = vlaneseq
    %v2655 = vshrl.u32 %v2654, 7
    %v2656 = vsub.s32 %v2653, %v2655
    %v2657 = vrot.slane %v2650, %v2656
    %v2658 = vcombine.low %v2633, %v2641
    %v2659 = vcombine.high %v2633, %v2641
    %v2661 = vunpack.c.l.s4 1934713408
    %v2662 = vunpack.c.0.s8 %v2661
    %v2663 = vlaneseq
    %v2664 = vshrl.u32 %v2663, 7
    %v2665 = vsub.s32 %v2662, %v2664
    %v2666 = vrot.slane %v2658, %v2665
    %v2668 = vunpack.c.l.s4 1934713408
    %v2669 = vunpack.c.0.s8 %v2668
    %v2670 = vlaneseq
    %v2671 = vshrl.u32 %v2670, 7
    %v2672 = vsub.s32 %v2669, %v2671
    %v2673 = vrot.slane %v2659, %v2672
    %v2674 = vcombine.low %v2649, %v2657
    %v2675 = vcombine.high %v2649, %v2657
    %v2677 = vunpack.c.l.s4 1934713408
    %v2678 = vunpack.c.0.s8 %v2677
    %v2679 = vlaneseq
    %v2680 = vshrl.u32 %v2679, 7
    %v2681 = vsub.s32 %v2678, %v2680
    %v2682 = vrot.slane %v2674, %v2681
    %v2684 = vunpack.c.l.s4 1934713408
    %v2685 = vunpack.c.0.s8 %v2684
    %v2686 = vlaneseq
    %v2687 = vshrl.u32 %v2686, 7
    %v2688 = vsub.s32 %v2685, %v2687
    %v2689 = vrot.slane %v2675, %v2688
    %v2690 = vcombine.low %v2666, %v2682
    %v2691 = vcombine.high %v2666, %v2682
    %v2692 = vcombine.low %v2673, %v2689
    %v2693 = vcombine.high %v2673, %v2689
    %2696 = vrot.lane.b32.xlu0 %v2623, 8
    %v2697 = vpop.permute.xlu0 %2696
    %2698 = vrot.lane.b32.xlu0 %v2691, 8
    %v2699 = vpop.permute.xlu0 %2698
    %2704 = vrot.lane.b32.xlu0 %v2624, 16
    %v2705 = vpop.permute.xlu0 %2704
    %2706 = vrot.lane.b32.xlu0 %v2692, 16
    %v2707 = vpop.permute.xlu0 %2706
    %2712 = vrot.lane.b32.xlu0 %v2625, 24
    %v2713 = vpop.permute.xlu0 %2712
    %2714 = vrot.lane.b32.xlu0 %v2693, 24
    %v2715 = vpop.permute.xlu0 %2714
    %v2718 = vsel %vm1119, %v2622, %v2697
    %v2719 = vsel %vm1119, %v2690, %v2699
    %vm2720 = vcmask 130048
    %v2721 = vsel %vm2720, %v2718, %v2705
    %v2722 = vsel %vm2720, %v2719, %v2707
    %vm2723 = vcmask 195584
    %v2724 = vsel %vm2723, %v2721, %v2713
    %v2725 = vsel %vm2723, %v2722, %v2715
    %v2726 = vld [vmem:[%s6] sm:$0xff]
    %v2727 = vld [vmem:[%s6 + $0x8] sm:$0xff]
    %v2728 = vld [vmem:[%s6 + $0x10] sm:$0xff]
    %v2729 = vld [vmem:[%s6 + $0x18] sm:$0xff]
    %v2730 = vld [vmem:[%s7] sm:$0x1]
    %v2732 = vlaneseq
    %v2733 = vshrl.u32 %v2732, 7
    %v2734 = vsub.s32 0, %v2733
    %v2735 = vrot.slane %v2730, %v2734
    %v2738 = vsel %vm68, %v2724, 0
    %v2741 = vsel %vm68, %v2725, 0
    %2743 = vmatprep.subr.mxu0 0.0
    %2744 = vmatpush1.msra.mxu0 %v2726
    %2745 = vmatprep.subr.mxu0 0.0
    %2746 = vmatpush1.msra.mxu0 %v2727
    %2747 = vmatprep.subr.mxu0 0.0
    %2748 = vmatpush1.msra.mxu0 %v2728
    %2749 = vmatprep.subr.mxu0 0.0
    %2750 = vmatpush1.msra.mxu0 %v2729
    %2751 = vmatprep.subr.mxu0 0.0
    %2752 = vmatpush1.msra.mxu0 0.0
    %2753 = vmatprep.subr.mxu0 0.0
    %2754 = vmatpush1.msra.mxu0 0.0
    %2755 = vmatprep.subr.mxu0 0.0
    %2756 = vmatpush1.msra.mxu0 0.0
    %2757 = vmatprep.subr.mxu0 0.0
    %2758 = vmatpush1.msra.mxu0 0.0
    %2759 = vmatprep.subr.mxu0 0.0
    %2760 = vmatpush1.msra.mxu0 0.0
    %2761 = vmatprep.subr.mxu0 0.0
    %2762 = vmatpush1.msra.mxu0 0.0
    %2763 = vmatprep.subr.mxu0 0.0
    %2764 = vmatpush1.msra.mxu0 0.0
    %2765 = vmatprep.subr.mxu0 0.0
    %2766 = vmatpush1.msra.mxu0 0.0
    %2767 = vmatprep.subr.mxu0 0.0
    %2768 = vmatpush1.msra.mxu0 0.0
    %2769 = vmatprep.subr.mxu0 0.0
    %2770 = vmatpush1.msra.mxu0 0.0
    %2771 = vmatprep.subr.mxu0 0.0
    %2772 = vmatpush1.msra.mxu0 0.0
    %2773 = vmatprep.subr.mxu0 0.0
    %2774 = vmatpush1.msra.mxu0 0.0
    %2775 = vmatprep.subr.mxu0 0.0
    %2776 = vmatpush1.msra.mxu0 0.0
    %2777 = vmatprep.subr.mxu0 0.0
    %2778 = vmatpush1.msra.mxu0 0.0
    %2779 = vmatprep.subr.mxu0 0.0
    %2780 = vmatpush1.msra.mxu0 0.0
    %2781 = vmatprep.subr.mxu0 0.0
    %2782 = vmatpush1.msra.mxu0 0.0
    %2783 = vmatprep.subr.mxu0 0.0
    %2784 = vmatpush1.msra.mxu0 0.0
    %2785 = vmatprep.subr.mxu0 0.0
    %2786 = vmatpush1.msra.mxu0 0.0
    %2787 = vmatprep.subr.mxu0 0.0
    %2788 = vmatpush1.msra.mxu0 0.0
    %2789 = vmatprep.subr.mxu0 0.0
    %2790 = vmatpush1.msra.mxu0 0.0
    %2791 = vmatprep.subr.mxu0 0.0
    %2792 = vmatpush1.msra.mxu0 0.0
    %2793 = vmatprep.subr.mxu0 0.0
    %2794 = vmatpush1.msra.mxu0 0.0
    %2795 = vmatprep.subr.mxu0 0.0
    %2796 = vmatpush1.msra.mxu0 0.0
    %2797 = vmatprep.subr.mxu0 0.0
    %2798 = vmatpush1.msra.mxu0 0.0
    %2799 = vmatprep.subr.mxu0 0.0
    %2800 = vmatpush1.msra.mxu0 0.0
    %2801 = vmatprep.subr.mxu0 0.0
    %2802 = vmatpush1.msra.mxu0 0.0
    %2803 = vmatprep.subr.mxu0 0.0
    %2804 = vmatpush1.msra.mxu0 0.0
    %2805 = vmatprep.subr.mxu0 0.0
    %2806 = vmatpush1.msra.mxu0 0.0
    %2807 = vmatprep.mubr.f32.mxu0 0.0
    %2808 = vmatmul.mubr.f32.gmra.mrb[0].mxu0 %v2738
    %v2809 = vpop.f32.mrb[0].mxu0
    %v2810 = vadd.f32 %v2735, %v2809
    %v2811 = vpop.f32.mrb[0].mxu0
    %2812 = vmatprep.mubr.f32.mxu0 0.0
    %2813 = vmatmul.mubr.f32.gmra.mrb[0].mxu0 %v2741
    %v2814 = vpop.f32.mrb[0].mxu0
    %v2815 = vadd.f32 %v2735, %v2814
    %v2816 = vpop.f32.mrb[0].mxu0
    %2817 = vdwg.mxu0
    %v2818 = vadd.f32 %v62, %v2810
    %v2819 = vadd.f32 %v63, %v2815
    %v2820 = vld [vmem:[%s8] sm:$0x1]
    %v2821 = vld [vmem:[%s9] sm:$0x1]
    %v2822 = vsel %vm68, %v2818, 0.0
    %2823 = vadd.xlane.f32.xlu0 %v2822
    %v2824 = vpop.xlane.xlu0 %2823
    %v2825 = vsel %vm68, %v2819, 0.0
    %2826 = vadd.xlane.f32.xlu0 %v2825
    %v2827 = vpop.xlane.xlu0 %2826
    %v2828 = vmul.f32 %v2824, %v75
    %v2829 = vmul.f32 %v2827, %v75
    %v2830 = vsub.f32 %v2818, %v2828
    %v2831 = vsub.f32 %v2819, %v2829
    %v2832 = vmul.f32 %v2830, %v2830
    %v2833 = vmul.f32 %v2831, %v2831
    %v2834 = vsel %vm68, %v2832, 0.0
    %2835 = vadd.xlane.f32.xlu0 %v2834
    %v2836 = vpop.xlane.xlu0 %2835
    %v2837 = vsel %vm68, %v2833, 0.0
    %2838 = vadd.xlane.f32.xlu0 %v2837
    %v2839 = vpop.xlane.xlu0 %2838
    %v2840 = vmul.f32 %v2836, %v88
    %v2841 = vmul.f32 %v2839, %v88
    %v2842 = vrsqrt.pop %v2840
    %v2843 = vmul.f32 %v2840, %v2842
    %vm2844 = vcmp.eq.f32.partialorder %v2840, inf
    %v2845 = vsel %vm2844, %v2840, %v2843
    %vm2846 = vcmp.eq.f32.partialorder %v2840, 0.0
    %v2847 = vand.u32 %v2840, 2147483648
    %v2848 = vsel %vm2846, %v2847, %v2845
    %v2849 = vrsqrt.pop %v2841
    %v2850 = vmul.f32 %v2841, %v2849
    %vm2851 = vcmp.eq.f32.partialorder %v2841, inf
    %v2852 = vsel %vm2851, %v2841, %v2850
    %vm2853 = vcmp.eq.f32.partialorder %v2841, 0.0
    %v2854 = vand.u32 %v2841, 2147483648
    %v2855 = vsel %vm2853, %v2854, %v2852
    %v2856 = vadd.f32 %v2848, 1e-06
    %v2857 = vadd.f32 %v2855, 1e-06
    %v2858 = vrcp.pop %v2856
    %v2859 = vrcp.pop %v2857
    %v2861 = vlaneseq
    %v2862 = vshrl.u32 %v2861, 7
    %v2863 = vsub.s32 0, %v2862
    %v2864 = vrot.slane %v2820, %v2863
    %v2866 = vmul.f32 %v2864, %v2830
    %v2867 = vmul.f32 %v2864, %v2831
    %v2868 = vmul.f32 %v2866, %v2858
    %v2869 = vmul.f32 %v2867, %v2859
    %v2871 = vlaneseq
    %v2872 = vshrl.u32 %v2871, 7
    %v2873 = vsub.s32 0, %v2872
    %v2874 = vrot.slane %v2821, %v2873
    %v2876 = vadd.f32 %v2868, %v2874
    %v2877 = vadd.f32 %v2869, %v2874
    %v2878 = vld [vmem:[%s10] sm:$0xff]
    %v2879 = vld [vmem:[%s10 + $0x8] sm:$0xff]
    %v2880 = vld [vmem:[%s10 + $0x10] sm:$0xff]
    %v2881 = vld [vmem:[%s10 + $0x18] sm:$0xff]
    %v2882 = vld [vmem:[%s11] sm:$0x1]
    %v2884 = vlaneseq
    %v2885 = vshrl.u32 %v2884, 7
    %v2886 = vsub.s32 0, %v2885
    %v2887 = vrot.slane %v2882, %v2886
    %v2890 = vsel %vm68, %v2876, 0
    %v2893 = vsel %vm68, %v2877, 0
    %2895 = vmatprep.subr.mxu0 0.0
    %2896 = vmatpush1.msra.mxu0 %v2878
    %2897 = vmatprep.subr.mxu0 0.0
    %2898 = vmatpush1.msra.mxu0 %v2879
    %2899 = vmatprep.subr.mxu0 0.0
    %2900 = vmatpush1.msra.mxu0 %v2880
    %2901 = vmatprep.subr.mxu0 0.0
    %2902 = vmatpush1.msra.mxu0 %v2881
    %2903 = vmatprep.subr.mxu0 0.0
    %2904 = vmatpush1.msra.mxu0 0.0
    %2905 = vmatprep.subr.mxu0 0.0
    %2906 = vmatpush1.msra.mxu0 0.0
    %2907 = vmatprep.subr.mxu0 0.0
    %2908 = vmatpush1.msra.mxu0 0.0
    %2909 = vmatprep.subr.mxu0 0.0
    %2910 = vmatpush1.msra.mxu0 0.0
    %2911 = vmatprep.subr.mxu0 0.0
    %2912 = vmatpush1.msra.mxu0 0.0
    %2913 = vmatprep.subr.mxu0 0.0
    %2914 = vmatpush1.msra.mxu0 0.0
    %2915 = vmatprep.subr.mxu0 0.0
    %2916 = vmatpush1.msra.mxu0 0.0
    %2917 = vmatprep.subr.mxu0 0.0
    %2918 = vmatpush1.msra.mxu0 0.0
    %2919 = vmatprep.subr.mxu0 0.0
    %2920 = vmatpush1.msra.mxu0 0.0
    %2921 = vmatprep.subr.mxu0 0.0
    %2922 = vmatpush1.msra.mxu0 0.0
    %2923 = vmatprep.subr.mxu0 0.0
    %2924 = vmatpush1.msra.mxu0 0.0
    %2925 = vmatprep.subr.mxu0 0.0
    %2926 = vmatpush1.msra.mxu0 0.0
    %2927 = vmatprep.subr.mxu0 0.0
    %2928 = vmatpush1.msra.mxu0 0.0
    %2929 = vmatprep.subr.mxu0 0.0
    %2930 = vmatpush1.msra.mxu0 0.0
    %2931 = vmatprep.subr.mxu0 0.0
    %2932 = vmatpush1.msra.mxu0 0.0
    %2933 = vmatprep.subr.mxu0 0.0
    %2934 = vmatpush1.msra.mxu0 0.0
    %2935 = vmatprep.subr.mxu0 0.0
    %2936 = vmatpush1.msra.mxu0 0.0
    %2937 = vmatprep.subr.mxu0 0.0
    %2938 = vmatpush1.msra.mxu0 0.0
    %2939 = vmatprep.subr.mxu0 0.0
    %2940 = vmatpush1.msra.mxu0 0.0
    %2941 = vmatprep.subr.mxu0 0.0
    %2942 = vmatpush1.msra.mxu0 0.0
    %2943 = vmatprep.subr.mxu0 0.0
    %2944 = vmatpush1.msra.mxu0 0.0
    %2945 = vmatprep.subr.mxu0 0.0
    %2946 = vmatpush1.msra.mxu0 0.0
    %2947 = vmatprep.subr.mxu0 0.0
    %2948 = vmatpush1.msra.mxu0 0.0
    %2949 = vmatprep.subr.mxu0 0.0
    %2950 = vmatpush1.msra.mxu0 0.0
    %2951 = vmatprep.subr.mxu0 0.0
    %2952 = vmatpush1.msra.mxu0 0.0
    %2953 = vmatprep.subr.mxu0 0.0
    %2954 = vmatpush1.msra.mxu0 0.0
    %2955 = vmatprep.subr.mxu0 0.0
    %2956 = vmatpush1.msra.mxu0 0.0
    %2957 = vmatprep.subr.mxu0 0.0
    %2958 = vmatpush1.msra.mxu0 0.0
    %2959 = vmatprep.mubr.f32.mxu0 0.0
    %2960 = vmatmul.mubr.f32.gmra.mrb[0].mxu0 %v2890
    %v2961 = vpop.f32.mrb[0].mxu0
    %v2962 = vadd.f32 %v2887, %v2961
    %v2963 = vpop.f32.mrb[0].mxu0
    %2964 = vmatprep.mubr.f32.mxu0 0.0
    %2965 = vmatmul.mubr.f32.gmra.mrb[0].mxu0 %v2893
    %v2966 = vpop.f32.mrb[0].mxu0
    %v2967 = vadd.f32 %v2887, %v2966
    %v2968 = vpop.f32.mrb[0].mxu0
    %2969 = vdwg.mxu0
    %v2970 = vmax.f32 %v2962, 0.0
    %v2971 = vmax.f32 %v2967, 0.0
    %v2972 = vld [vmem:[%s12] sm:$0xff]
    %v2973 = vld [vmem:[%s12 + $0x8] sm:$0xff]
    %v2974 = vld [vmem:[%s12 + $0x10] sm:$0xff]
    %v2975 = vld [vmem:[%s12 + $0x18] sm:$0xff]
    %v2976 = vld [vmem:[%s12 + $0x20] sm:$0xff]
    %v2977 = vld [vmem:[%s12 + $0x28] sm:$0xff]
    %v2978 = vld [vmem:[%s12 + $0x30] sm:$0xff]
    %v2979 = vld [vmem:[%s12 + $0x38] sm:$0xff]
    %v2980 = vld [vmem:[%s13] sm:$0x1]
    %v2982 = vlaneseq
    %v2983 = vshrl.u32 %v2982, 7
    %v2984 = vsub.s32 0, %v2983
    %v2985 = vrot.slane %v2980, %v2984
    %vm2987 = vcmask 523264
    %v2989 = vsel %vm2987, %v2970, 0
    %v2992 = vsel %vm2987, %v2971, 0
    %2994 = vmatprep.subr.mxu0 0.0
    %2995 = vmatpush1.msra.mxu0 %v2972
    %2996 = vmatprep.subr.mxu0 0.0
    %2997 = vmatpush1.msra.mxu0 %v2973
    %2998 = vmatprep.subr.mxu0 0.0
    %2999 = vmatpush1.msra.mxu0 %v2974
    %3000 = vmatprep.subr.mxu0 0.0
    %3001 = vmatpush1.msra.mxu0 %v2975
    %3002 = vmatprep.subr.mxu0 0.0
    %3003 = vmatpush1.msra.mxu0 %v2976
    %3004 = vmatprep.subr.mxu0 0.0
    %3005 = vmatpush1.msra.mxu0 %v2977
    %3006 = vmatprep.subr.mxu0 0.0
    %3007 = vmatpush1.msra.mxu0 %v2978
    %3008 = vmatprep.subr.mxu0 0.0
    %3009 = vmatpush1.msra.mxu0 %v2979
    %3010 = vmatprep.subr.mxu0 0.0
    %3011 = vmatpush1.msra.mxu0 0.0
    %3012 = vmatprep.subr.mxu0 0.0
    %3013 = vmatpush1.msra.mxu0 0.0
    %3014 = vmatprep.subr.mxu0 0.0
    %3015 = vmatpush1.msra.mxu0 0.0
    %3016 = vmatprep.subr.mxu0 0.0
    %3017 = vmatpush1.msra.mxu0 0.0
    %3018 = vmatprep.subr.mxu0 0.0
    %3019 = vmatpush1.msra.mxu0 0.0
    %3020 = vmatprep.subr.mxu0 0.0
    %3021 = vmatpush1.msra.mxu0 0.0
    %3022 = vmatprep.subr.mxu0 0.0
    %3023 = vmatpush1.msra.mxu0 0.0
    %3024 = vmatprep.subr.mxu0 0.0
    %3025 = vmatpush1.msra.mxu0 0.0
    %3026 = vmatprep.subr.mxu0 0.0
    %3027 = vmatpush1.msra.mxu0 0.0
    %3028 = vmatprep.subr.mxu0 0.0
    %3029 = vmatpush1.msra.mxu0 0.0
    %3030 = vmatprep.subr.mxu0 0.0
    %3031 = vmatpush1.msra.mxu0 0.0
    %3032 = vmatprep.subr.mxu0 0.0
    %3033 = vmatpush1.msra.mxu0 0.0
    %3034 = vmatprep.subr.mxu0 0.0
    %3035 = vmatpush1.msra.mxu0 0.0
    %3036 = vmatprep.subr.mxu0 0.0
    %3037 = vmatpush1.msra.mxu0 0.0
    %3038 = vmatprep.subr.mxu0 0.0
    %3039 = vmatpush1.msra.mxu0 0.0
    %3040 = vmatprep.subr.mxu0 0.0
    %3041 = vmatpush1.msra.mxu0 0.0
    %3042 = vmatprep.subr.mxu0 0.0
    %3043 = vmatpush1.msra.mxu0 0.0
    %3044 = vmatprep.subr.mxu0 0.0
    %3045 = vmatpush1.msra.mxu0 0.0
    %3046 = vmatprep.subr.mxu0 0.0
    %3047 = vmatpush1.msra.mxu0 0.0
    %3048 = vmatprep.subr.mxu0 0.0
    %3049 = vmatpush1.msra.mxu0 0.0
    %3050 = vmatprep.subr.mxu0 0.0
    %3051 = vmatpush1.msra.mxu0 0.0
    %3052 = vmatprep.subr.mxu0 0.0
    %3053 = vmatpush1.msra.mxu0 0.0
    %3054 = vmatprep.subr.mxu0 0.0
    %3055 = vmatpush1.msra.mxu0 0.0
    %3056 = vmatprep.subr.mxu0 0.0
    %3057 = vmatpush1.msra.mxu0 0.0
    %3058 = vmatprep.mubr.f32.mxu0 0.0
    %3059 = vmatmul.mubr.f32.gmra.mrb[0].mxu0 %v2989
    %v3060 = vpop.f32.mrb[0].mxu0
    %v3061 = vadd.f32 %v2985, %v3060
    %v3062 = vpop.f32.mrb[0].mxu0
    %3063 = vmatprep.mubr.f32.mxu0 0.0
    %3064 = vmatmul.mubr.f32.gmra.mrb[0].mxu0 %v2992
    %v3065 = vpop.f32.mrb[0].mxu0
    %v3066 = vadd.f32 %v2985, %v3065
    %v3067 = vpop.f32.mrb[0].mxu0
    %3068 = vdwg.mxu0
    %v3069 = vadd.f32 %v2818, %v3061
    %v3070 = vadd.f32 %v2819, %v3066
    %3071 = vst.msk [vmem:[#allocation5] sm:$0xff] %vm68, %v3069
    %3072 = vst.msk [vmem:[#allocation5 + $0x8] sm:$0xff] %vm68, %v3070
    // Predicated region
    $region62: #{encoder_block.1} parent=1 // pred_check
      _
    $region63: #{encoder_block.1} parent=1 // pred_check_branch
      %3074 = sbr.rel (0) target = $region65
    $region64: #{encoder_block.1} parent=1 // pred_region
      %s3076 = ssub.s32 256, 256
      %3077 = vsyncadd [#allocation4], %s3076
      %s3078 = sshll.u32 [#allocation5], 4
      %s3079 = int_to_ptr.vmem [resolvable:$true] %s3078
      %3084 = dma.vmem_to_hbm [thread:$0]  %s3079, 256, %s14, [#allocation4], 128, 128, 8
    $region65: #{encoder_block.1} parent=1 // pred_fallthru
      _
    // Predicated region
    $region66: #{encoder_block.1} parent=1 // pred_check
      _
    $region67: #{encoder_block.1} parent=1 // pred_check_branch
      %3086 = sbr.rel (0) target = $region69
    $region68: #{encoder_block.1} parent=1 // pred_region
      %3087 = dma.done [#allocation4], 256
    $region69: #{encoder_block.1} parent=1 // pred_fallthru
      _
    %3088 = vsyncpa [#allocation3], 1
    %3089 = vsyncpa [#allocation4], 1

</llo_original>
